<compile_context>
chip_gen: v7x
topology: tpu7x:2x2x1
jax: 0.10.0
libtpu: 0.0.40
codegen_flags: <defaults>
</compile_context>

<pallas_src>
import math
import jax
import jax.numpy as jnp
from jax.experimental import pallas as pl
from jax.experimental.pallas import tpu as pltpu

# ---------------- problem sizes (small, consistent with the module) -----------
L = 8              # target sequence length
S = 8              # source sequence length
N = 2              # batch
E = 64             # feat_dim (embed dim), divisible by num_heads
H = 8              # num_heads (fixed by the module)
HD = E // H        # head dim
NL = N * L
NS = N * S
FFN_HIDDEN = 1024  # fixed by the module
FFN_CHUNK = 512    # FFN hidden dim processed in FFN_HIDDEN//FFN_CHUNK grid steps
LN_EPS = 1e-5

# rows of the packed small-parameter table (single (9, E) f32 array, one DMA)
_BQ, _BK, _BV, _BO, _G1, _BE1, _B2, _G2, _BE2 = range(9)


def _layernorm(x, gamma, beta):
    mu = jnp.mean(x, axis=-1, keepdims=True)
    xc = x - mu
    var = jnp.mean(xc * xc, axis=-1, keepdims=True)
    return xc * jax.lax.rsqrt(var + LN_EPS) * gamma + beta


def attention_kernel(q_ref, k_ref, v_ref, w_in_ref, wo_ref, pp_ref,
                     w1_ref, b1_ref, w2_ref, o_ref, x1_sc, acc_sc):
    f32, bf16 = jnp.float32, jnp.bfloat16
    c = pl.program_id(0)

    # ---- step 0: multi-head attention + residual + LayerNorm #1 -------------
    @pl.when(c == 0)
    def _():
        q_res = q_ref[...]                                       # (NL, E) f32 residual
        # lane-dense in-projections: (rows,64)@(64,64) bf16 MXU, f32 accumulation
        Q = jnp.dot(q_res.astype(bf16), w_in_ref[0],
                    preferred_element_type=f32) + pp_ref[_BQ:_BQ + 1, :]
        K = jnp.dot(k_ref[...].astype(bf16), w_in_ref[1],
                    preferred_element_type=f32) + pp_ref[_BK:_BK + 1, :]
        V = jnp.dot(v_ref[...].astype(bf16), w_in_ref[2],
                    preferred_element_type=f32) + pp_ref[_BV:_BV + 1, :]

        # additive mask forbidding cross-batch attention (rows are batch-major)
        ri = jax.lax.broadcasted_iota(jnp.int32, (NL, NS), 0)
        ci = jax.lax.broadcasted_iota(jnp.int32, (NL, NS), 1)

        def blk(b):
            return ((ri >= b * L) & (ri < (b + 1) * L)
                    & (ci >= b * S) & (ci < (b + 1) * S))

        same = blk(0)
        for b in range(1, N):
            same = same | blk(b)
        bias = jnp.where(same, 0.0, -1e30).astype(f32)

        scale = 1.0 / math.sqrt(HD)
        ctx_heads = []
        for h in range(H):                                       # static unroll
            sl = slice(h * HD, (h + 1) * HD)
            Qh = Q[:, sl].astype(bf16)                           # (NL, HD)
            Kh = K[:, sl].astype(bf16)                           # (NS, HD)
            Vh = V[:, sl].astype(bf16)                           # (NS, HD)
            s = jax.lax.dot_general(Qh, Kh, (((1,), (1,)), ((), ())),
                                    preferred_element_type=f32) * scale + bias
            m = jnp.max(s, axis=-1, keepdims=True)
            e = jnp.exp(s - m)
            p = e / jnp.sum(e, axis=-1, keepdims=True)           # exact softmax
            ctx_heads.append(jnp.dot(p.astype(bf16), Vh,
                                     preferred_element_type=f32))
        ctx = jnp.concatenate(ctx_heads, axis=-1)                # (NL, E) head-concat

        attn = jnp.dot(ctx.astype(bf16), wo_ref[...],
                       preferred_element_type=f32) + pp_ref[_BO:_BO + 1, :]
        x1_sc[...] = _layernorm(attn + q_res,
                                pp_ref[_G1:_G1 + 1, :], pp_ref[_BE1:_BE1 + 1, :])
        acc_sc[...] = jnp.zeros_like(acc_sc)

    # ---- every step: one FFN hidden-dim chunk --------------------------------
    x1 = x1_sc[...]
    h1 = jnp.dot(x1.astype(bf16), w1_ref[...],
                 preferred_element_type=f32) + b1_ref[...]       # (NL, CHUNK)
    h1 = jnp.maximum(h1, 0.0)
    # w2 block is (E, CHUNK) = W2 columns; contract the CHUNK axis (trans_b form)
    acc_sc[...] += jax.lax.dot_general(h1.astype(bf16), w2_ref[...],
                                       (((1,), (1,)), ((), ())),
                                       preferred_element_type=f32)

    # ---- last step: + b2, residual, LayerNorm #2, store ----------------------
    @pl.when(c == pl.num_programs(0) - 1)
    def _():
        ffn = acc_sc[...] + pp_ref[_B2:_B2 + 1, :]
        o_ref[...] = _layernorm(x1_sc[...] + ffn,
                                pp_ref[_G2:_G2 + 1, :],
                                pp_ref[_BE2:_BE2 + 1, :]).astype(o_ref.dtype)


def pack_params(p):
    """Re-arrange module parameters into the (lane-dense) layout the kernel uses."""
    small = jnp.stack([p["bq"], p["bk"], p["bv"], p["bo"],
                       p["ln1_g"], p["ln1_b"], p["b2"],
                       p["ln2_g"], p["ln2_b"]], axis=0).astype(jnp.float32)   # (9, E)
    return dict(
        w_in=jnp.stack([p["wqT"], p["wkT"], p["wvT"]], axis=0).astype(jnp.bfloat16),  # (3,E,E)
        wo=p["woT"].astype(jnp.bfloat16),                                             # (E,E)
        small=small,
        w1=p["w1T"].astype(jnp.bfloat16),                          # (E, 1024)
        b1=p["b1"].reshape(1, FFN_HIDDEN).astype(jnp.float32),     # (1, 1024)
        w2=jnp.transpose(p["w2T"]).astype(jnp.bfloat16),           # (E, 1024)  (= W2)
    )


@jax.jit
def attention_forward(q, k, v, packed):
    """q: (L, N, E), k/v: (S, N, E) -> (L, N, E).  attention_mask is None."""
    q2d = jnp.transpose(q, (1, 0, 2)).reshape(NL, E)               # (N*L, E) f32
    k2d = jnp.transpose(k, (1, 0, 2)).reshape(NS, E)
    v2d = jnp.transpose(v, (1, 0, 2)).reshape(NS, E)

    n_chunks = FFN_HIDDEN // FFN_CHUNK
    out2d = pl.pallas_call(
        attention_kernel,
        out_shape=jax.ShapeDtypeStruct((NL, E), jnp.float32),
        grid=(n_chunks,),
        in_specs=[
            pl.BlockSpec((NL, E), lambda c: (0, 0)),         # q (also residual)
            pl.BlockSpec((NS, E), lambda c: (0, 0)),         # k
            pl.BlockSpec((NS, E), lambda c: (0, 0)),         # v
            pl.BlockSpec((3, E, E), lambda c: (0, 0, 0)),    # stacked in-proj weights
            pl.BlockSpec((E, E), lambda c: (0, 0)),          # out-proj weight
            pl.BlockSpec((9, E), lambda c: (0, 0)),          # packed small params
            pl.BlockSpec((E, FFN_CHUNK), lambda c: (0, c)),  # W1^T column chunk
            pl.BlockSpec((1, FFN_CHUNK), lambda c: (0, c)),  # b1 chunk
            pl.BlockSpec((E, FFN_CHUNK), lambda c: (0, c)),  # W2 column chunk
        ],
        out_specs=pl.BlockSpec((NL, E), lambda c: (0, 0)),
        scratch_shapes=[pltpu.VMEM((NL, E), jnp.float32),    # x1 (post-LN1)
                        pltpu.VMEM((NL, E), jnp.float32)],   # FFN accumulator
        compiler_params=pltpu.CompilerParams(
            dimension_semantics=("arbitrary",)),
    )(q2d, k2d, v2d, packed["w_in"], packed["wo"], packed["small"],
      packed["w1"], packed["b1"], packed["w2"])

    return jnp.transpose(out2d.reshape(N, L, E), (1, 0, 2))        # back to (L, N, E)


def reference_forward(q, k, v, p):
    """Pure-JAX f32 reference of the same module math (seq-first in/out)."""
    f32 = jnp.float32
    qb = jnp.transpose(q, (1, 0, 2)).astype(f32)                   # (N, L, E)
    kb = jnp.transpose(k, (1, 0, 2)).astype(f32)
    vb = jnp.transpose(v, (1, 0, 2)).astype(f32)

    Q = qb @ p["wqT"].astype(f32) + p["bq"]
    K = kb @ p["wkT"].astype(f32) + p["bk"]
    V = vb @ p["wvT"].astype(f32) + p["bv"]

    def split(x, T):
        return x.reshape(N, T, H, HD).transpose(0, 2, 1, 3)        # (N, H, T, HD)

    Qh, Kh, Vh = split(Q, L), split(K, S), split(V, S)
    s = jnp.einsum("nhld,nhsd->nhls", Qh, Kh) / math.sqrt(HD)
    pm = jax.nn.softmax(s, axis=-1)
    o = jnp.einsum("nhls,nhsd->nhld", pm, Vh)                      # (N, H, L, HD)
    o = o.transpose(0, 2, 1, 3).reshape(N, L, E)
    attn = o @ p["woT"].astype(f32) + p["bo"]

    def ln(x, g, b):
        mu = x.mean(-1, keepdims=True)
        var = ((x - mu) ** 2).mean(-1, keepdims=True)
        return (x - mu) / jnp.sqrt(var + LN_EPS) * g + b

    x1 = ln(attn + qb, p["ln1_g"], p["ln1_b"])
    h1 = jnp.maximum(x1 @ p["w1T"].astype(f32) + p["b1"], 0.0)
    x2 = ln(x1 + h1 @ p["w2T"].astype(f32) + p["b2"], p["ln2_g"], p["ln2_b"])
    return jnp.transpose(x2, (1, 0, 2))                            # (L, N, E)


def init_params(key):
    ks = jax.random.split(key, 12)
    sc = 0.05
    bf = lambda kk, shape: (sc * jax.random.normal(kk, shape, jnp.float32)).astype(jnp.bfloat16)
    return {
        # in-proj (stored pre-transposed so the math is x @ W^T; bf16 = MXU-native)
        "wqT": bf(ks[0], (E, E)),
        "wkT": bf(ks[1], (E, E)),
        "wvT": bf(ks[2], (E, E)),
        "bq": sc * jax.random.normal(ks[3], (E,), jnp.float32),
        "bk": sc * jax.random.normal(ks[4], (E,), jnp.float32),
        "bv": sc * jax.random.normal(ks[5], (E,), jnp.float32),
        # out-proj
        "woT": bf(ks[6], (E, E)),
        "bo": sc * jax.random.normal(ks[7], (E,), jnp.float32),
        # LayerNorm 1 (gamma=1, beta=0, like nn.LayerNorm init)
        "ln1_g": jnp.ones((E,), jnp.float32),
        "ln1_b": jnp.zeros((E,), jnp.float32),
        # FFN
        "w1T": bf(ks[8], (E, FFN_HIDDEN)),
        "b1": sc * jax.random.normal(ks[9], (FFN_HIDDEN,), jnp.float32),
        "w2T": bf(ks[10], (FFN_HIDDEN, E)),
        "b2": sc * jax.random.normal(ks[11], (E,), jnp.float32),
        # LayerNorm 2
        "ln2_g": jnp.ones((E,), jnp.float32),
        "ln2_b": jnp.zeros((E,), jnp.float32),
    }


if __name__ == "__main__":
    key = jax.random.PRNGKey(0)
    kq, kk, kv, kp = jax.random.split(key, 4)

    # PyTorch MultiheadAttention (batch_first=False) layout: (L, N, E) / (S, N, E)
    q = jax.random.normal(kq, (L, N, E), jnp.float32)
    k = jax.random.normal(kk, (S, N, E), jnp.float32)
    v = jax.random.normal(kv, (S, N, E), jnp.float32)
    params = init_params(kp)
    packed = pack_params(params)

    out = attention_forward(q, k, v, packed)
    out = jax.block_until_ready(out)

    ref = reference_forward(q, k, v, params)
    assert out.shape == (L, N, E)
    # bf16 MXU operands in the kernel vs f32 reference activations.
    assert jnp.allclose(out, ref, rtol=2e-2, atol=2e-2), "mismatch vs reference"

    print("KERNEL_OK")
</pallas_src>

<mosaic_0001>
module attributes {stable_mosaic.version = 11 : i64} {
  func.func @attention_kernel(%arg0: i32, %arg1: memref<16x64xf32, #tpu.memory_space<vmem>>, %arg2: memref<16x64xf32, #tpu.memory_space<vmem>>, %arg3: memref<16x64xf32, #tpu.memory_space<vmem>>, %arg4: memref<3x64x64xbf16, #tpu.memory_space<vmem>>, %arg5: memref<64x64xbf16, #tpu.memory_space<vmem>>, %arg6: memref<9x64xf32, #tpu.memory_space<vmem>>, %arg7: memref<64x512xbf16, #tpu.memory_space<vmem>>, %arg8: memref<1x512xf32, #tpu.memory_space<vmem>>, %arg9: memref<64x512xbf16, #tpu.memory_space<vmem>>, %arg10: memref<16x64xf32, #tpu.memory_space<vmem>>, %arg11: memref<16x64xf32, #tpu.memory_space<vmem>>, %arg12: memref<16x64xf32, #tpu.memory_space<vmem>>) attributes {dimension_semantics = [#tpu.dimension_semantics<arbitrary>], iteration_bounds = array<i64: 2>, scalar_prefetch = 0 : i64, scratch_operands = 2 : i64, tpu.core_type = #tpu.core_type<tc>, window_params = [{pipeline_mode = #tpu.pipeline_mode<synchronous>, transform_indices = @transform_0, window_bounds = array<i64: 16, 64>}, {pipeline_mode = #tpu.pipeline_mode<synchronous>, transform_indices = @transform_1, window_bounds = array<i64: 16, 64>}, {pipeline_mode = #tpu.pipeline_mode<synchronous>, transform_indices = @transform_2, window_bounds = array<i64: 16, 64>}, {pipeline_mode = #tpu.pipeline_mode<synchronous>, transform_indices = @transform_3, window_bounds = array<i64: 3, 64, 64>}, {pipeline_mode = #tpu.pipeline_mode<synchronous>, transform_indices = @transform_4, window_bounds = array<i64: 64, 64>}, {pipeline_mode = #tpu.pipeline_mode<synchronous>, transform_indices = @transform_5, window_bounds = array<i64: 9, 64>}, {transform_indices = @transform_6, window_bounds = array<i64: 64, 512>}, {transform_indices = @transform_7, window_bounds = array<i64: 1, 512>}, {transform_indices = @transform_8, window_bounds = array<i64: 64, 512>}, {pipeline_mode = #tpu.pipeline_mode<synchronous>, transform_indices = @transform_9, window_bounds = array<i64: 16, 64>}]} {
    %c0_i32 = arith.constant 0 : i32
    %0 = arith.cmpi eq, %arg0, %c0_i32 : i32
    %1 = arith.extui %0 : i1 to i32
    %c0_i32_0 = arith.constant 0 : i32
    %2 = arith.cmpi ne, %1, %c0_i32_0 : i32
    scf.if %2 {
      %c0_15 = arith.constant 0 : index
      %c0_16 = arith.constant 0 : index
      %21 = vector.load %arg1[%c0_15, %c0_16] : memref<16x64xf32, #tpu.memory_space<vmem>>, vector<16x64xf32>
      %22 = arith.truncf %21 : vector<16x64xf32> to vector<16x64xbf16>
      %c0_17 = arith.constant 0 : index
      %c0_18 = arith.constant 0 : index
      %c0_19 = arith.constant 0 : index
      %23 = vector.load %arg4[%c0_17, %c0_18, %c0_19] : memref<3x64x64xbf16, #tpu.memory_space<vmem>>, vector<1x64x64xbf16>
      %24 = vector.shape_cast %23 : vector<1x64x64xbf16> to vector<64x64xbf16>
      %cst_20 = arith.constant dense<0.000000e+00> : vector<16x64xf32>
      %25 = tpu.matmul %22, %24, %cst_20 {dimension_numbers = #tpu.dot_dimension_numbers<[1], [0], [0], [1], [0, 0, 1, 1], [], []>} : vector<16x64xbf16>, vector<64x64xbf16>, vector<16x64xf32> -> vector<16x64xf32>
      %c0_21 = arith.constant 0 : index
      %c0_22 = arith.constant 0 : index
      %26 = vector.load %arg6[%c0_21, %c0_22] : memref<9x64xf32, #tpu.memory_space<vmem>>, vector<1x64xf32>
      %27 = vector.broadcast %26 : vector<1x64xf32> to vector<16x64xf32>
      %28 = arith.addf %25, %27 : vector<16x64xf32>
      %c0_23 = arith.constant 0 : index
      %c0_24 = arith.constant 0 : index
      %29 = vector.load %arg2[%c0_23, %c0_24] : memref<16x64xf32, #tpu.memory_space<vmem>>, vector<16x64xf32>
      %30 = arith.truncf %29 : vector<16x64xf32> to vector<16x64xbf16>
      %c1 = arith.constant 1 : index
      %c0_25 = arith.constant 0 : index
      %c0_26 = arith.constant 0 : index
      %31 = vector.load %arg4[%c1, %c0_25, %c0_26] : memref<3x64x64xbf16, #tpu.memory_space<vmem>>, vector<1x64x64xbf16>
      %32 = vector.shape_cast %31 : vector<1x64x64xbf16> to vector<64x64xbf16>
      %cst_27 = arith.constant dense<0.000000e+00> : vector<16x64xf32>
      %33 = tpu.matmul %30, %32, %cst_27 {dimension_numbers = #tpu.dot_dimension_numbers<[1], [0], [0], [1], [0, 0, 1, 1], [], []>} : vector<16x64xbf16>, vector<64x64xbf16>, vector<16x64xf32> -> vector<16x64xf32>
      %c1_28 = arith.constant 1 : index
      %c0_29 = arith.constant 0 : index
      %34 = vector.load %arg6[%c1_28, %c0_29] : memref<9x64xf32, #tpu.memory_space<vmem>>, vector<1x64xf32>
      %35 = vector.broadcast %34 : vector<1x64xf32> to vector<16x64xf32>
      %36 = arith.addf %33, %35 : vector<16x64xf32>
      %c0_30 = arith.constant 0 : index
      %c0_31 = arith.constant 0 : index
      %37 = vector.load %arg3[%c0_30, %c0_31] : memref<16x64xf32, #tpu.memory_space<vmem>>, vector<16x64xf32>
      %38 = arith.truncf %37 : vector<16x64xf32> to vector<16x64xbf16>
      %c2 = arith.constant 2 : index
      %c0_32 = arith.constant 0 : index
      %c0_33 = arith.constant 0 : index
      %39 = vector.load %arg4[%c2, %c0_32, %c0_33] : memref<3x64x64xbf16, #tpu.memory_space<vmem>>, vector<1x64x64xbf16>
      %40 = vector.shape_cast %39 : vector<1x64x64xbf16> to vector<64x64xbf16>
      %cst_34 = arith.constant dense<0.000000e+00> : vector<16x64xf32>
      %41 = tpu.matmul %38, %40, %cst_34 {dimension_numbers = #tpu.dot_dimension_numbers<[1], [0], [0], [1], [0, 0, 1, 1], [], []>} : vector<16x64xbf16>, vector<64x64xbf16>, vector<16x64xf32> -> vector<16x64xf32>
      %c2_35 = arith.constant 2 : index
      %c0_36 = arith.constant 0 : index
      %42 = vector.load %arg6[%c2_35, %c0_36] : memref<9x64xf32, #tpu.memory_space<vmem>>, vector<1x64xf32>
      %43 = vector.broadcast %42 : vector<1x64xf32> to vector<16x64xf32>
      %44 = arith.addf %41, %43 : vector<16x64xf32>
      %45 = tpu.iota {dimensions = array<i32: 0>} : vector<16x16xi32>
      %46 = tpu.iota {dimensions = array<i32: 1>} : vector<16x16xi32>
      %c0_i32_37 = arith.constant 0 : i32
      %47 = vector.broadcast %c0_i32_37 : i32 to vector<16x16xi32>
      %48 = arith.cmpi sge, %45, %47 : vector<16x16xi32>
      %c8_i32 = arith.constant 8 : i32
      %49 = vector.broadcast %c8_i32 : i32 to vector<16x16xi32>
      %50 = arith.cmpi slt, %45, %49 : vector<16x16xi32>
      %51 = arith.andi %48, %50 : vector<16x16xi1>
      %c0_i32_38 = arith.constant 0 : i32
      %52 = vector.broadcast %c0_i32_38 : i32 to vector<16x16xi32>
      %53 = arith.cmpi sge, %46, %52 : vector<16x16xi32>
      %54 = arith.andi %51, %53 : vector<16x16xi1>
      %c8_i32_39 = arith.constant 8 : i32
      %55 = vector.broadcast %c8_i32_39 : i32 to vector<16x16xi32>
      %56 = arith.cmpi slt, %46, %55 : vector<16x16xi32>
      %57 = arith.andi %54, %56 : vector<16x16xi1>
      %c8_i32_40 = arith.constant 8 : i32
      %58 = vector.broadcast %c8_i32_40 : i32 to vector<16x16xi32>
      %59 = arith.cmpi sge, %45, %58 : vector<16x16xi32>
      %c16_i32 = arith.constant 16 : i32
      %60 = vector.broadcast %c16_i32 : i32 to vector<16x16xi32>
      %61 = arith.cmpi slt, %45, %60 : vector<16x16xi32>
      %62 = arith.andi %59, %61 : vector<16x16xi1>
      %c8_i32_41 = arith.constant 8 : i32
      %63 = vector.broadcast %c8_i32_41 : i32 to vector<16x16xi32>
      %64 = arith.cmpi sge, %46, %63 : vector<16x16xi32>
      %65 = arith.andi %62, %64 : vector<16x16xi1>
      %c16_i32_42 = arith.constant 16 : i32
      %66 = vector.broadcast %c16_i32_42 : i32 to vector<16x16xi32>
      %67 = arith.cmpi slt, %46, %66 : vector<16x16xi32>
      %68 = arith.andi %65, %67 : vector<16x16xi1>
      %69 = arith.ori %57, %68 : vector<16x16xi1>
      %cst_43 = arith.constant 0.000000e+00 : f32
      %cst_44 = arith.constant -1.000000e+30 : f32
      %70 = vector.broadcast %cst_43 : f32 to vector<16x16xf32>
      %71 = vector.broadcast %cst_44 : f32 to vector<16x16xf32>
      %72 = arith.select %69, %70, %71 : vector<16x16xi1>, vector<16x16xf32>
      %73 = vector.extract_strided_slice %28 {offsets = [0, 0], sizes = [16, 8], strides = [1, 1]} : vector<16x64xf32> to vector<16x8xf32>
      %74 = arith.truncf %73 : vector<16x8xf32> to vector<16x8xbf16>
      %75 = vector.extract_strided_slice %36 {offsets = [0, 0], sizes = [16, 8], strides = [1, 1]} : vector<16x64xf32> to vector<16x8xf32>
      %76 = arith.truncf %75 : vector<16x8xf32> to vector<16x8xbf16>
      %77 = vector.extract_strided_slice %44 {offsets = [0, 0], sizes = [16, 8], strides = [1, 1]} : vector<16x64xf32> to vector<16x8xf32>
      %78 = arith.truncf %77 : vector<16x8xf32> to vector<16x8xbf16>
      %cst_45 = arith.constant dense<0.000000e+00> : vector<16x16xf32>
      %79 = tpu.matmul %74, %76, %cst_45 {dimension_numbers = #tpu.dot_dimension_numbers<[1], [1], [0], [0], [0, 0, 1, 0], [], []>} : vector<16x8xbf16>, vector<16x8xbf16>, vector<16x16xf32> -> vector<16x16xf32>
      %cst_46 = arith.constant 0.353553385 : f32
      %80 = vector.broadcast %cst_46 : f32 to vector<16x16xf32>
      %81 = arith.mulf %79, %80 : vector<16x16xf32>
      %82 = arith.addf %81, %72 : vector<16x16xf32>
      %cst_47 = arith.constant dense<0xFF800000> : vector<16xf32>
      %83 = vector.multi_reduction <maximumf>, %82, %cst_47 [1] : vector<16x16xf32> to vector<16xf32>
      %84 = vector.shape_cast %83 : vector<16xf32> to vector<16x1xf32>
      %85 = vector.broadcast %84 : vector<16x1xf32> to vector<16x16xf32>
      %86 = arith.subf %82, %85 : vector<16x16xf32>
      %87 = math.exp %86 : vector<16x16xf32>
      %cst_48 = arith.constant dense<0.000000e+00> : vector<16xf32>
      %88 = vector.multi_reduction <add>, %87, %cst_48 [1] : vector<16x16xf32> to vector<16xf32>
      %89 = vector.shape_cast %88 : vector<16xf32> to vector<16x1xf32>
      %90 = vector.broadcast %89 : vector<16x1xf32> to vector<16x16xf32>
      %91 = arith.divf %87, %90 : vector<16x16xf32>
      %92 = arith.truncf %91 : vector<16x16xf32> to vector<16x16xbf16>
      %cst_49 = arith.constant dense<0.000000e+00> : vector<16x8xf32>
      %93 = tpu.matmul %92, %78, %cst_49 {dimension_numbers = #tpu.dot_dimension_numbers<[1], [0], [0], [1], [0, 0, 1, 1], [], []>} : vector<16x16xbf16>, vector<16x8xbf16>, vector<16x8xf32> -> vector<16x8xf32>
      %94 = vector.extract_strided_slice %28 {offsets = [0, 8], sizes = [16, 8], strides = [1, 1]} : vector<16x64xf32> to vector<16x8xf32>
      %95 = arith.truncf %94 : vector<16x8xf32> to vector<16x8xbf16>
      %96 = vector.extract_strided_slice %36 {offsets = [0, 8], sizes = [16, 8], strides = [1, 1]} : vector<16x64xf32> to vector<16x8xf32>
      %97 = arith.truncf %96 : vector<16x8xf32> to vector<16x8xbf16>
      %98 = vector.extract_strided_slice %44 {offsets = [0, 8], sizes = [16, 8], strides = [1, 1]} : vector<16x64xf32> to vector<16x8xf32>
      %99 = arith.truncf %98 : vector<16x8xf32> to vector<16x8xbf16>
      %cst_50 = arith.constant dense<0.000000e+00> : vector<16x16xf32>
      %100 = tpu.matmul %95, %97, %cst_50 {dimension_numbers = #tpu.dot_dimension_numbers<[1], [1], [0], [0], [0, 0, 1, 0], [], []>} : vector<16x8xbf16>, vector<16x8xbf16>, vector<16x16xf32> -> vector<16x16xf32>
      %cst_51 = arith.constant 0.353553385 : f32
      %101 = vector.broadcast %cst_51 : f32 to vector<16x16xf32>
      %102 = arith.mulf %100, %101 : vector<16x16xf32>
      %103 = arith.addf %102, %72 : vector<16x16xf32>
      %cst_52 = arith.constant dense<0xFF800000> : vector<16xf32>
      %104 = vector.multi_reduction <maximumf>, %103, %cst_52 [1] : vector<16x16xf32> to vector<16xf32>
      %105 = vector.shape_cast %104 : vector<16xf32> to vector<16x1xf32>
      %106 = vector.broadcast %105 : vector<16x1xf32> to vector<16x16xf32>
      %107 = arith.subf %103, %106 : vector<16x16xf32>
      %108 = math.exp %107 : vector<16x16xf32>
      %cst_53 = arith.constant dense<0.000000e+00> : vector<16xf32>
      %109 = vector.multi_reduction <add>, %108, %cst_53 [1] : vector<16x16xf32> to vector<16xf32>
      %110 = vector.shape_cast %109 : vector<16xf32> to vector<16x1xf32>
      %111 = vector.broadcast %110 : vector<16x1xf32> to vector<16x16xf32>
      %112 = arith.divf %108, %111 : vector<16x16xf32>
      %113 = arith.truncf %112 : vector<16x16xf32> to vector<16x16xbf16>
      %cst_54 = arith.constant dense<0.000000e+00> : vector<16x8xf32>
      %114 = tpu.matmul %113, %99, %cst_54 {dimension_numbers = #tpu.dot_dimension_numbers<[1], [0], [0], [1], [0, 0, 1, 1], [], []>} : vector<16x16xbf16>, vector<16x8xbf16>, vector<16x8xf32> -> vector<16x8xf32>
      %115 = vector.extract_strided_slice %28 {offsets = [0, 16], sizes = [16, 8], strides = [1, 1]} : vector<16x64xf32> to vector<16x8xf32>
      %116 = arith.truncf %115 : vector<16x8xf32> to vector<16x8xbf16>
      %117 = vector.extract_strided_slice %36 {offsets = [0, 16], sizes = [16, 8], strides = [1, 1]} : vector<16x64xf32> to vector<16x8xf32>
      %118 = arith.truncf %117 : vector<16x8xf32> to vector<16x8xbf16>
      %119 = vector.extract_strided_slice %44 {offsets = [0, 16], sizes = [16, 8], strides = [1, 1]} : vector<16x64xf32> to vector<16x8xf32>
      %120 = arith.truncf %119 : vector<16x8xf32> to vector<16x8xbf16>
      %cst_55 = arith.constant dense<0.000000e+00> : vector<16x16xf32>
      %121 = tpu.matmul %116, %118, %cst_55 {dimension_numbers = #tpu.dot_dimension_numbers<[1], [1], [0], [0], [0, 0, 1, 0], [], []>} : vector<16x8xbf16>, vector<16x8xbf16>, vector<16x16xf32> -> vector<16x16xf32>
      %cst_56 = arith.constant 0.353553385 : f32
      %122 = vector.broadcast %cst_56 : f32 to vector<16x16xf32>
      %123 = arith.mulf %121, %122 : vector<16x16xf32>
      %124 = arith.addf %123, %72 : vector<16x16xf32>
      %cst_57 = arith.constant dense<0xFF800000> : vector<16xf32>
      %125 = vector.multi_reduction <maximumf>, %124, %cst_57 [1] : vector<16x16xf32> to vector<16xf32>
      %126 = vector.shape_cast %125 : vector<16xf32> to vector<16x1xf32>
      %127 = vector.broadcast %126 : vector<16x1xf32> to vector<16x16xf32>
      %128 = arith.subf %124, %127 : vector<16x16xf32>
      %129 = math.exp %128 : vector<16x16xf32>
      %cst_58 = arith.constant dense<0.000000e+00> : vector<16xf32>
      %130 = vector.multi_reduction <add>, %129, %cst_58 [1] : vector<16x16xf32> to vector<16xf32>
      %131 = vector.shape_cast %130 : vector<16xf32> to vector<16x1xf32>
      %132 = vector.broadcast %131 : vector<16x1xf32> to vector<16x16xf32>
      %133 = arith.divf %129, %132 : vector<16x16xf32>
      %134 = arith.truncf %133 : vector<16x16xf32> to vector<16x16xbf16>
      %cst_59 = arith.constant dense<0.000000e+00> : vector<16x8xf32>
      %135 = tpu.matmul %134, %120, %cst_59 {dimension_numbers = #tpu.dot_dimension_numbers<[1], [0], [0], [1], [0, 0, 1, 1], [], []>} : vector<16x16xbf16>, vector<16x8xbf16>, vector<16x8xf32> -> vector<16x8xf32>
      %136 = vector.extract_strided_slice %28 {offsets = [0, 24], sizes = [16, 8], strides = [1, 1]} : vector<16x64xf32> to vector<16x8xf32>
      %137 = arith.truncf %136 : vector<16x8xf32> to vector<16x8xbf16>
      %138 = vector.extract_strided_slice %36 {offsets = [0, 24], sizes = [16, 8], strides = [1, 1]} : vector<16x64xf32> to vector<16x8xf32>
      %139 = arith.truncf %138 : vector<16x8xf32> to vector<16x8xbf16>
      %140 = vector.extract_strided_slice %44 {offsets = [0, 24], sizes = [16, 8], strides = [1, 1]} : vector<16x64xf32> to vector<16x8xf32>
      %141 = arith.truncf %140 : vector<16x8xf32> to vector<16x8xbf16>
      %cst_60 = arith.constant dense<0.000000e+00> : vector<16x16xf32>
      %142 = tpu.matmul %137, %139, %cst_60 {dimension_numbers = #tpu.dot_dimension_numbers<[1], [1], [0], [0], [0, 0, 1, 0], [], []>} : vector<16x8xbf16>, vector<16x8xbf16>, vector<16x16xf32> -> vector<16x16xf32>
      %cst_61 = arith.constant 0.353553385 : f32
      %143 = vector.broadcast %cst_61 : f32 to vector<16x16xf32>
      %144 = arith.mulf %142, %143 : vector<16x16xf32>
      %145 = arith.addf %144, %72 : vector<16x16xf32>
      %cst_62 = arith.constant dense<0xFF800000> : vector<16xf32>
      %146 = vector.multi_reduction <maximumf>, %145, %cst_62 [1] : vector<16x16xf32> to vector<16xf32>
      %147 = vector.shape_cast %146 : vector<16xf32> to vector<16x1xf32>
      %148 = vector.broadcast %147 : vector<16x1xf32> to vector<16x16xf32>
      %149 = arith.subf %145, %148 : vector<16x16xf32>
      %150 = math.exp %149 : vector<16x16xf32>
      %cst_63 = arith.constant dense<0.000000e+00> : vector<16xf32>
      %151 = vector.multi_reduction <add>, %150, %cst_63 [1] : vector<16x16xf32> to vector<16xf32>
      %152 = vector.shape_cast %151 : vector<16xf32> to vector<16x1xf32>
      %153 = vector.broadcast %152 : vector<16x1xf32> to vector<16x16xf32>
      %154 = arith.divf %150, %153 : vector<16x16xf32>
      %155 = arith.truncf %154 : vector<16x16xf32> to vector<16x16xbf16>
      %cst_64 = arith.constant dense<0.000000e+00> : vector<16x8xf32>
      %156 = tpu.matmul %155, %141, %cst_64 {dimension_numbers = #tpu.dot_dimension_numbers<[1], [0], [0], [1], [0, 0, 1, 1], [], []>} : vector<16x16xbf16>, vector<16x8xbf16>, vector<16x8xf32> -> vector<16x8xf32>
      %157 = vector.extract_strided_slice %28 {offsets = [0, 32], sizes = [16, 8], strides = [1, 1]} : vector<16x64xf32> to vector<16x8xf32>
      %158 = arith.truncf %157 : vector<16x8xf32> to vector<16x8xbf16>
      %159 = vector.extract_strided_slice %36 {offsets = [0, 32], sizes = [16, 8], strides = [1, 1]} : vector<16x64xf32> to vector<16x8xf32>
      %160 = arith.truncf %159 : vector<16x8xf32> to vector<16x8xbf16>
      %161 = vector.extract_strided_slice %44 {offsets = [0, 32], sizes = [16, 8], strides = [1, 1]} : vector<16x64xf32> to vector<16x8xf32>
      %162 = arith.truncf %161 : vector<16x8xf32> to vector<16x8xbf16>
      %cst_65 = arith.constant dense<0.000000e+00> : vector<16x16xf32>
      %163 = tpu.matmul %158, %160, %cst_65 {dimension_numbers = #tpu.dot_dimension_numbers<[1], [1], [0], [0], [0, 0, 1, 0], [], []>} : vector<16x8xbf16>, vector<16x8xbf16>, vector<16x16xf32> -> vector<16x16xf32>
      %cst_66 = arith.constant 0.353553385 : f32
      %164 = vector.broadcast %cst_66 : f32 to vector<16x16xf32>
      %165 = arith.mulf %163, %164 : vector<16x16xf32>
      %166 = arith.addf %165, %72 : vector<16x16xf32>
      %cst_67 = arith.constant dense<0xFF800000> : vector<16xf32>
      %167 = vector.multi_reduction <maximumf>, %166, %cst_67 [1] : vector<16x16xf32> to vector<16xf32>
      %168 = vector.shape_cast %167 : vector<16xf32> to vector<16x1xf32>
      %169 = vector.broadcast %168 : vector<16x1xf32> to vector<16x16xf32>
      %170 = arith.subf %166, %169 : vector<16x16xf32>
      %171 = math.exp %170 : vector<16x16xf32>
      %cst_68 = arith.constant dense<0.000000e+00> : vector<16xf32>
      %172 = vector.multi_reduction <add>, %171, %cst_68 [1] : vector<16x16xf32> to vector<16xf32>
      %173 = vector.shape_cast %172 : vector<16xf32> to vector<16x1xf32>
      %174 = vector.broadcast %173 : vector<16x1xf32> to vector<16x16xf32>
      %175 = arith.divf %171, %174 : vector<16x16xf32>
      %176 = arith.truncf %175 : vector<16x16xf32> to vector<16x16xbf16>
      %cst_69 = arith.constant dense<0.000000e+00> : vector<16x8xf32>
      %177 = tpu.matmul %176, %162, %cst_69 {dimension_numbers = #tpu.dot_dimension_numbers<[1], [0], [0], [1], [0, 0, 1, 1], [], []>} : vector<16x16xbf16>, vector<16x8xbf16>, vector<16x8xf32> -> vector<16x8xf32>
      %178 = vector.extract_strided_slice %28 {offsets = [0, 40], sizes = [16, 8], strides = [1, 1]} : vector<16x64xf32> to vector<16x8xf32>
      %179 = arith.truncf %178 : vector<16x8xf32> to vector<16x8xbf16>
      %180 = vector.extract_strided_slice %36 {offsets = [0, 40], sizes = [16, 8], strides = [1, 1]} : vector<16x64xf32> to vector<16x8xf32>
      %181 = arith.truncf %180 : vector<16x8xf32> to vector<16x8xbf16>
      %182 = vector.extract_strided_slice %44 {offsets = [0, 40], sizes = [16, 8], strides = [1, 1]} : vector<16x64xf32> to vector<16x8xf32>
      %183 = arith.truncf %182 : vector<16x8xf32> to vector<16x8xbf16>
      %cst_70 = arith.constant dense<0.000000e+00> : vector<16x16xf32>
      %184 = tpu.matmul %179, %181, %cst_70 {dimension_numbers = #tpu.dot_dimension_numbers<[1], [1], [0], [0], [0, 0, 1, 0], [], []>} : vector<16x8xbf16>, vector<16x8xbf16>, vector<16x16xf32> -> vector<16x16xf32>
      %cst_71 = arith.constant 0.353553385 : f32
      %185 = vector.broadcast %cst_71 : f32 to vector<16x16xf32>
      %186 = arith.mulf %184, %185 : vector<16x16xf32>
      %187 = arith.addf %186, %72 : vector<16x16xf32>
      %cst_72 = arith.constant dense<0xFF800000> : vector<16xf32>
      %188 = vector.multi_reduction <maximumf>, %187, %cst_72 [1] : vector<16x16xf32> to vector<16xf32>
      %189 = vector.shape_cast %188 : vector<16xf32> to vector<16x1xf32>
      %190 = vector.broadcast %189 : vector<16x1xf32> to vector<16x16xf32>
      %191 = arith.subf %187, %190 : vector<16x16xf32>
      %192 = math.exp %191 : vector<16x16xf32>
      %cst_73 = arith.constant dense<0.000000e+00> : vector<16xf32>
      %193 = vector.multi_reduction <add>, %192, %cst_73 [1] : vector<16x16xf32> to vector<16xf32>
      %194 = vector.shape_cast %193 : vector<16xf32> to vector<16x1xf32>
      %195 = vector.broadcast %194 : vector<16x1xf32> to vector<16x16xf32>
      %196 = arith.divf %192, %195 : vector<16x16xf32>
      %197 = arith.truncf %196 : vector<16x16xf32> to vector<16x16xbf16>
      %cst_74 = arith.constant dense<0.000000e+00> : vector<16x8xf32>
      %198 = tpu.matmul %197, %183, %cst_74 {dimension_numbers = #tpu.dot_dimension_numbers<[1], [0], [0], [1], [0, 0, 1, 1], [], []>} : vector<16x16xbf16>, vector<16x8xbf16>, vector<16x8xf32> -> vector<16x8xf32>
      %199 = vector.extract_strided_slice %28 {offsets = [0, 48], sizes = [16, 8], strides = [1, 1]} : vector<16x64xf32> to vector<16x8xf32>
      %200 = arith.truncf %199 : vector<16x8xf32> to vector<16x8xbf16>
      %201 = vector.extract_strided_slice %36 {offsets = [0, 48], sizes = [16, 8], strides = [1, 1]} : vector<16x64xf32> to vector<16x8xf32>
      %202 = arith.truncf %201 : vector<16x8xf32> to vector<16x8xbf16>
      %203 = vector.extract_strided_slice %44 {offsets = [0, 48], sizes = [16, 8], strides = [1, 1]} : vector<16x64xf32> to vector<16x8xf32>
      %204 = arith.truncf %203 : vector<16x8xf32> to vector<16x8xbf16>
      %cst_75 = arith.constant dense<0.000000e+00> : vector<16x16xf32>
      %205 = tpu.matmul %200, %202, %cst_75 {dimension_numbers = #tpu.dot_dimension_numbers<[1], [1], [0], [0], [0, 0, 1, 0], [], []>} : vector<16x8xbf16>, vector<16x8xbf16>, vector<16x16xf32> -> vector<16x16xf32>
      %cst_76 = arith.constant 0.353553385 : f32
      %206 = vector.broadcast %cst_76 : f32 to vector<16x16xf32>
      %207 = arith.mulf %205, %206 : vector<16x16xf32>
      %208 = arith.addf %207, %72 : vector<16x16xf32>
      %cst_77 = arith.constant dense<0xFF800000> : vector<16xf32>
      %209 = vector.multi_reduction <maximumf>, %208, %cst_77 [1] : vector<16x16xf32> to vector<16xf32>
      %210 = vector.shape_cast %209 : vector<16xf32> to vector<16x1xf32>
      %211 = vector.broadcast %210 : vector<16x1xf32> to vector<16x16xf32>
      %212 = arith.subf %208, %211 : vector<16x16xf32>
      %213 = math.exp %212 : vector<16x16xf32>
      %cst_78 = arith.constant dense<0.000000e+00> : vector<16xf32>
      %214 = vector.multi_reduction <add>, %213, %cst_78 [1] : vector<16x16xf32> to vector<16xf32>
      %215 = vector.shape_cast %214 : vector<16xf32> to vector<16x1xf32>
      %216 = vector.broadcast %215 : vector<16x1xf32> to vector<16x16xf32>
      %217 = arith.divf %213, %216 : vector<16x16xf32>
      %218 = arith.truncf %217 : vector<16x16xf32> to vector<16x16xbf16>
      %cst_79 = arith.constant dense<0.000000e+00> : vector<16x8xf32>
      %219 = tpu.matmul %218, %204, %cst_79 {dimension_numbers = #tpu.dot_dimension_numbers<[1], [0], [0], [1], [0, 0, 1, 1], [], []>} : vector<16x16xbf16>, vector<16x8xbf16>, vector<16x8xf32> -> vector<16x8xf32>
      %220 = vector.extract_strided_slice %28 {offsets = [0, 56], sizes = [16, 8], strides = [1, 1]} : vector<16x64xf32> to vector<16x8xf32>
      %221 = arith.truncf %220 : vector<16x8xf32> to vector<16x8xbf16>
      %222 = vector.extract_strided_slice %36 {offsets = [0, 56], sizes = [16, 8], strides = [1, 1]} : vector<16x64xf32> to vector<16x8xf32>
      %223 = arith.truncf %222 : vector<16x8xf32> to vector<16x8xbf16>
      %224 = vector.extract_strided_slice %44 {offsets = [0, 56], sizes = [16, 8], strides = [1, 1]} : vector<16x64xf32> to vector<16x8xf32>
      %225 = arith.truncf %224 : vector<16x8xf32> to vector<16x8xbf16>
      %cst_80 = arith.constant dense<0.000000e+00> : vector<16x16xf32>
      %226 = tpu.matmul %221, %223, %cst_80 {dimension_numbers = #tpu.dot_dimension_numbers<[1], [1], [0], [0], [0, 0, 1, 0], [], []>} : vector<16x8xbf16>, vector<16x8xbf16>, vector<16x16xf32> -> vector<16x16xf32>
      %cst_81 = arith.constant 0.353553385 : f32
      %227 = vector.broadcast %cst_81 : f32 to vector<16x16xf32>
      %228 = arith.mulf %226, %227 : vector<16x16xf32>
      %229 = arith.addf %228, %72 : vector<16x16xf32>
      %cst_82 = arith.constant dense<0xFF800000> : vector<16xf32>
      %230 = vector.multi_reduction <maximumf>, %229, %cst_82 [1] : vector<16x16xf32> to vector<16xf32>
      %231 = vector.shape_cast %230 : vector<16xf32> to vector<16x1xf32>
      %232 = vector.broadcast %231 : vector<16x1xf32> to vector<16x16xf32>
      %233 = arith.subf %229, %232 : vector<16x16xf32>
      %234 = math.exp %233 : vector<16x16xf32>
      %cst_83 = arith.constant dense<0.000000e+00> : vector<16xf32>
      %235 = vector.multi_reduction <add>, %234, %cst_83 [1] : vector<16x16xf32> to vector<16xf32>
      %236 = vector.shape_cast %235 : vector<16xf32> to vector<16x1xf32>
      %237 = vector.broadcast %236 : vector<16x1xf32> to vector<16x16xf32>
      %238 = arith.divf %234, %237 : vector<16x16xf32>
      %239 = arith.truncf %238 : vector<16x16xf32> to vector<16x16xbf16>
      %cst_84 = arith.constant dense<0.000000e+00> : vector<16x8xf32>
      %240 = tpu.matmul %239, %225, %cst_84 {dimension_numbers = #tpu.dot_dimension_numbers<[1], [0], [0], [1], [0, 0, 1, 1], [], []>} : vector<16x16xbf16>, vector<16x8xbf16>, vector<16x8xf32> -> vector<16x8xf32>
      %241 = tpu.concatenate %93, %114, %135, %156, %177, %198, %219, %240 in 1 : vector<16x8xf32>, vector<16x8xf32>, vector<16x8xf32>, vector<16x8xf32>, vector<16x8xf32>, vector<16x8xf32>, vector<16x8xf32>, vector<16x8xf32> -> vector<16x64xf32>
      %242 = arith.truncf %241 : vector<16x64xf32> to vector<16x64xbf16>
      %c0_85 = arith.constant 0 : index
      %c0_86 = arith.constant 0 : index
      %243 = vector.load %arg5[%c0_85, %c0_86] : memref<64x64xbf16, #tpu.memory_space<vmem>>, vector<64x64xbf16>
      %cst_87 = arith.constant dense<0.000000e+00> : vector<16x64xf32>
      %244 = tpu.matmul %242, %243, %cst_87 {dimension_numbers = #tpu.dot_dimension_numbers<[1], [0], [0], [1], [0, 0, 1, 1], [], []>} : vector<16x64xbf16>, vector<64x64xbf16>, vector<16x64xf32> -> vector<16x64xf32>
      %c3 = arith.constant 3 : index
      %c0_88 = arith.constant 0 : index
      %245 = vector.load %arg6[%c3, %c0_88] : memref<9x64xf32, #tpu.memory_space<vmem>>, vector<1x64xf32>
      %246 = vector.broadcast %245 : vector<1x64xf32> to vector<16x64xf32>
      %247 = arith.addf %244, %246 : vector<16x64xf32>
      %248 = arith.addf %247, %21 : vector<16x64xf32>
      %c4 = arith.constant 4 : index
      %c0_89 = arith.constant 0 : index
      %249 = vector.load %arg6[%c4, %c0_89] : memref<9x64xf32, #tpu.memory_space<vmem>>, vector<1x64xf32>
      %c5 = arith.constant 5 : index
      %c0_90 = arith.constant 0 : index
      %250 = vector.load %arg6[%c5, %c0_90] : memref<9x64xf32, #tpu.memory_space<vmem>>, vector<1x64xf32>
      %cst_91 = arith.constant dense<0.000000e+00> : vector<16xf32>
      %251 = vector.multi_reduction <add>, %248, %cst_91 [1] : vector<16x64xf32> to vector<16xf32>
      %252 = vector.shape_cast %251 : vector<16xf32> to vector<16x1xf32>
      %cst_92 = arith.constant 6.400000e+01 : f32
      %253 = vector.broadcast %cst_92 : f32 to vector<16x1xf32>
      %254 = arith.divf %252, %253 : vector<16x1xf32>
      %255 = vector.broadcast %254 : vector<16x1xf32> to vector<16x64xf32>
      %256 = arith.subf %248, %255 : vector<16x64xf32>
      %257 = arith.mulf %256, %256 : vector<16x64xf32>
      %cst_93 = arith.constant dense<0.000000e+00> : vector<16xf32>
      %258 = vector.multi_reduction <add>, %257, %cst_93 [1] : vector<16x64xf32> to vector<16xf32>
      %259 = vector.shape_cast %258 : vector<16xf32> to vector<16x1xf32>
      %cst_94 = arith.constant 6.400000e+01 : f32
      %260 = vector.broadcast %cst_94 : f32 to vector<16x1xf32>
      %261 = arith.divf %259, %260 : vector<16x1xf32>
      %cst_95 = arith.constant 9.99999974E-6 : f32
      %262 = vector.broadcast %cst_95 : f32 to vector<16x1xf32>
      %263 = arith.addf %261, %262 : vector<16x1xf32>
      %264 = math.rsqrt %263 : vector<16x1xf32>
      %265 = vector.broadcast %264 : vector<16x1xf32> to vector<16x64xf32>
      %266 = arith.mulf %256, %265 : vector<16x64xf32>
      %267 = vector.broadcast %249 : vector<1x64xf32> to vector<16x64xf32>
      %268 = arith.mulf %266, %267 : vector<16x64xf32>
      %269 = vector.broadcast %250 : vector<1x64xf32> to vector<16x64xf32>
      %270 = arith.addf %268, %269 : vector<16x64xf32>
      %c0_96 = arith.constant 0 : index
      %c0_97 = arith.constant 0 : index
      %271 = vector.load %arg11[%c0_96, %c0_97] : memref<16x64xf32, #tpu.memory_space<vmem>>, vector<16x64xf32>
      tpu.vector_store %arg11[%c0_96, %c0_97], %270 {strides = array<i32>} : memref<16x64xf32, #tpu.memory_space<vmem>>, vector<16x64xf32>,
      %cst_98 = arith.constant 0.000000e+00 : f32
      %272 = vector.broadcast %cst_98 : f32 to vector<16x64xf32>
      %c0_99 = arith.constant 0 : index
      %c0_100 = arith.constant 0 : index
      %273 = vector.load %arg12[%c0_99, %c0_100] : memref<16x64xf32, #tpu.memory_space<vmem>>, vector<16x64xf32>
      tpu.vector_store %arg12[%c0_99, %c0_100], %272 {strides = array<i32>} : memref<16x64xf32, #tpu.memory_space<vmem>>, vector<16x64xf32>,
    } else {
    }
    %c0 = arith.constant 0 : index
    %c0_1 = arith.constant 0 : index
    %3 = vector.load %arg11[%c0, %c0_1] : memref<16x64xf32, #tpu.memory_space<vmem>>, vector<16x64xf32>
    %4 = arith.truncf %3 : vector<16x64xf32> to vector<16x64xbf16>
    %c0_2 = arith.constant 0 : index
    %c0_3 = arith.constant 0 : index
    %5 = vector.load %arg7[%c0_2, %c0_3] : memref<64x512xbf16, #tpu.memory_space<vmem>>, vector<64x512xbf16>
    %cst = arith.constant dense<0.000000e+00> : vector<16x512xf32>
    %6 = tpu.matmul %4, %5, %cst {dimension_numbers = #tpu.dot_dimension_numbers<[1], [0], [0], [1], [0, 0, 1, 1], [], []>} : vector<16x64xbf16>, vector<64x512xbf16>, vector<16x512xf32> -> vector<16x512xf32>
    %c0_4 = arith.constant 0 : index
    %c0_5 = arith.constant 0 : index
    %7 = vector.load %arg8[%c0_4, %c0_5] : memref<1x512xf32, #tpu.memory_space<vmem>>, vector<1x512xf32>
    %8 = vector.broadcast %7 : vector<1x512xf32> to vector<16x512xf32>
    %9 = arith.addf %6, %8 : vector<16x512xf32>
    %cst_6 = arith.constant 0.000000e+00 : f32
    %10 = vector.broadcast %cst_6 : f32 to vector<16x512xf32>
    %11 = arith.maximumf %9, %10 : vector<16x512xf32>
    %c0_7 = arith.constant 0 : index
    %c0_8 = arith.constant 0 : index
    %12 = vector.load %arg12[%c0_7, %c0_8] : memref<16x64xf32, #tpu.memory_space<vmem>>, vector<16x64xf32>
    %13 = arith.truncf %11 : vector<16x512xf32> to vector<16x512xbf16>
    %c0_9 = arith.constant 0 : index
    %c0_10 = arith.constant 0 : index
    %14 = vector.load %arg9[%c0_9, %c0_10] : memref<64x512xbf16, #tpu.memory_space<vmem>>, vector<64x512xbf16>
    %cst_11 = arith.constant dense<0.000000e+00> : vector<16x64xf32>
    %15 = tpu.matmul %13, %14, %cst_11 {dimension_numbers = #tpu.dot_dimension_numbers<[1], [1], [0], [0], [0, 0, 1, 0], [], []>} : vector<16x512xbf16>, vector<64x512xbf16>, vector<16x64xf32> -> vector<16x64xf32>
    %16 = arith.addf %12, %15 : vector<16x64xf32>
    %c0_12 = arith.constant 0 : index
    %c0_13 = arith.constant 0 : index
    %17 = vector.load %arg12[%c0_12, %c0_13] : memref<16x64xf32, #tpu.memory_space<vmem>>, vector<16x64xf32>
    tpu.vector_store %arg12[%c0_12, %c0_13], %16 {strides = array<i32>} : memref<16x64xf32, #tpu.memory_space<vmem>>, vector<16x64xf32>,
    %c1_i32 = arith.constant 1 : i32
    %18 = arith.cmpi eq, %arg0, %c1_i32 : i32
    %19 = arith.extui %18 : i1 to i32
    %c0_i32_14 = arith.constant 0 : i32
    %20 = arith.cmpi ne, %19, %c0_i32_14 : i32
    scf.if %20 {
      %c0_15 = arith.constant 0 : index
      %c0_16 = arith.constant 0 : index
      %21 = vector.load %arg12[%c0_15, %c0_16] : memref<16x64xf32, #tpu.memory_space<vmem>>, vector<16x64xf32>
      %c6 = arith.constant 6 : index
      %c0_17 = arith.constant 0 : index
      %22 = vector.load %arg6[%c6, %c0_17] : memref<9x64xf32, #tpu.memory_space<vmem>>, vector<1x64xf32>
      %23 = vector.broadcast %22 : vector<1x64xf32> to vector<16x64xf32>
      %24 = arith.addf %21, %23 : vector<16x64xf32>
      %c0_18 = arith.constant 0 : index
      %c0_19 = arith.constant 0 : index
      %25 = vector.load %arg11[%c0_18, %c0_19] : memref<16x64xf32, #tpu.memory_space<vmem>>, vector<16x64xf32>
      %26 = arith.addf %25, %24 : vector<16x64xf32>
      %c7 = arith.constant 7 : index
      %c0_20 = arith.constant 0 : index
      %27 = vector.load %arg6[%c7, %c0_20] : memref<9x64xf32, #tpu.memory_space<vmem>>, vector<1x64xf32>
      %c8 = arith.constant 8 : index
      %c0_21 = arith.constant 0 : index
      %28 = vector.load %arg6[%c8, %c0_21] : memref<9x64xf32, #tpu.memory_space<vmem>>, vector<1x64xf32>
      %cst_22 = arith.constant dense<0.000000e+00> : vector<16xf32>
      %29 = vector.multi_reduction <add>, %26, %cst_22 [1] : vector<16x64xf32> to vector<16xf32>
      %30 = vector.shape_cast %29 : vector<16xf32> to vector<16x1xf32>
      %cst_23 = arith.constant 6.400000e+01 : f32
      %31 = vector.broadcast %cst_23 : f32 to vector<16x1xf32>
      %32 = arith.divf %30, %31 : vector<16x1xf32>
      %33 = vector.broadcast %32 : vector<16x1xf32> to vector<16x64xf32>
      %34 = arith.subf %26, %33 : vector<16x64xf32>
      %35 = arith.mulf %34, %34 : vector<16x64xf32>
      %cst_24 = arith.constant dense<0.000000e+00> : vector<16xf32>
      %36 = vector.multi_reduction <add>, %35, %cst_24 [1] : vector<16x64xf32> to vector<16xf32>
      %37 = vector.shape_cast %36 : vector<16xf32> to vector<16x1xf32>
      %cst_25 = arith.constant 6.400000e+01 : f32
      %38 = vector.broadcast %cst_25 : f32 to vector<16x1xf32>
      %39 = arith.divf %37, %38 : vector<16x1xf32>
      %cst_26 = arith.constant 9.99999974E-6 : f32
      %40 = vector.broadcast %cst_26 : f32 to vector<16x1xf32>
      %41 = arith.addf %39, %40 : vector<16x1xf32>
      %42 = math.rsqrt %41 : vector<16x1xf32>
      %43 = vector.broadcast %42 : vector<16x1xf32> to vector<16x64xf32>
      %44 = arith.mulf %34, %43 : vector<16x64xf32>
      %45 = vector.broadcast %27 : vector<1x64xf32> to vector<16x64xf32>
      %46 = arith.mulf %44, %45 : vector<16x64xf32>
      %47 = vector.broadcast %28 : vector<1x64xf32> to vector<16x64xf32>
      %48 = arith.addf %46, %47 : vector<16x64xf32>
      %c0_27 = arith.constant 0 : index
      %c0_28 = arith.constant 0 : index
      %49 = vector.load %arg10[%c0_27, %c0_28] : memref<16x64xf32, #tpu.memory_space<vmem>>, vector<16x64xf32>
      tpu.vector_store %arg10[%c0_27, %c0_28], %48 {strides = array<i32>} : memref<16x64xf32, #tpu.memory_space<vmem>>, vector<16x64xf32>,
    } else {
    }
    return
  }
  func.func @transform_0(%arg0: i32) -> (i32, i32) {
    %c0_i32 = arith.constant 0 : i32
    %c0_i32_0 = arith.constant 0 : i32
    %c0_i32_1 = arith.constant 0 : i32
    return %c0_i32, %c0_i32_0 : i32, i32
  }
  func.func @transform_1(%arg0: i32) -> (i32, i32) {
    %c0_i32 = arith.constant 0 : i32
    %c0_i32_0 = arith.constant 0 : i32
    %c0_i32_1 = arith.constant 0 : i32
    return %c0_i32, %c0_i32_0 : i32, i32
  }
  func.func @transform_2(%arg0: i32) -> (i32, i32) {
    %c0_i32 = arith.constant 0 : i32
    %c0_i32_0 = arith.constant 0 : i32
    %c0_i32_1 = arith.constant 0 : i32
    return %c0_i32, %c0_i32_0 : i32, i32
  }
  func.func @transform_3(%arg0: i32) -> (i32, i32, i32) {
    %c0_i32 = arith.constant 0 : i32
    %c0_i32_0 = arith.constant 0 : i32
    %c0_i32_1 = arith.constant 0 : i32
    %c0_i32_2 = arith.constant 0 : i32
    return %c0_i32, %c0_i32_0, %c0_i32_1 : i32, i32, i32
  }
  func.func @transform_4(%arg0: i32) -> (i32, i32) {
    %c0_i32 = arith.constant 0 : i32
    %c0_i32_0 = arith.constant 0 : i32
    %c0_i32_1 = arith.constant 0 : i32
    return %c0_i32, %c0_i32_0 : i32, i32
  }
  func.func @transform_5(%arg0: i32) -> (i32, i32) {
    %c0_i32 = arith.constant 0 : i32
    %c0_i32_0 = arith.constant 0 : i32
    %c0_i32_1 = arith.constant 0 : i32
    return %c0_i32, %c0_i32_0 : i32, i32
  }
  func.func @transform_6(%arg0: i32) -> (i32, i32) {
    %c0_i32 = arith.constant 0 : i32
    %c0_i32_0 = arith.constant 0 : i32
    return %c0_i32, %arg0 : i32, i32
  }
  func.func @transform_7(%arg0: i32) -> (i32, i32) {
    %c0_i32 = arith.constant 0 : i32
    %c0_i32_0 = arith.constant 0 : i32
    return %c0_i32, %arg0 : i32, i32
  }
  func.func @transform_8(%arg0: i32) -> (i32, i32) {
    %c0_i32 = arith.constant 0 : i32
    %c0_i32_0 = arith.constant 0 : i32
    return %c0_i32, %arg0 : i32, i32
  }
  func.func @transform_9(%arg0: i32) -> (i32, i32) {
    %c0_i32 = arith.constant 0 : i32
    %c0_i32_0 = arith.constant 0 : i32
    %c0_i32_1 = arith.constant 0 : i32
    return %c0_i32, %c0_i32_0 : i32, i32
  }
}

</mosaic_0001>

<llo_original>
// kernel: attention_forward.1
$region0: #{attention_forward.1}
  #allocation0 [shape = 'u32[]', space=smem, size = 0x4, offset = 0x4, fixed_abs, tag = 'smem constant byte address 0x4 - core index']
  #allocation1 [shape = 'u32[144,128]{1,0:T(1,128)}', space=vmem, size = 0x12000, scoped, tag = 'internal scratch']
  #allocation2 [shape = 'f32[16,64]{1,0:T(8,128)}', space=vmem, size = 0x2000, scoped, tag = 'scratch operand']
  #allocation3 [shape = 'f32[16,64]{1,0:T(8,128)}', space=vmem, size = 0x2000, scoped, tag = 'scratch operand']
  %s0 = inlined_call_operand.vmem [shape: f32[16,64], index: 0, kind: input, shape index: {}]
  %s1 = inlined_call_operand.vmem [shape: f32[16,64], index: 1, kind: input, shape index: {}]
  %s2 = inlined_call_operand.vmem [shape: f32[16,64], index: 2, kind: input, shape index: {}]
  %s3 = inlined_call_operand.vmem [shape: bf16[3,64,64], index: 3, kind: input, shape index: {}]
  %s4 = inlined_call_operand.vmem [shape: bf16[64,64], index: 4, kind: input, shape index: {}]
  %s5 = inlined_call_operand.hbm [shape: f32[9,64], index: 5, kind: input, shape index: {}]
  %s6 = inlined_call_operand.hbm [shape: bf16[64,1024], index: 6, kind: input, shape index: {}]
  %s7 = inlined_call_operand.vmem [shape: f32[1,1024], index: 7, kind: input, shape index: {}]
  %s8 = inlined_call_operand.hbm [shape: bf16[64,1024], index: 8, kind: input, shape index: {}]
  %s9 = inlined_call_operand.vmem [shape: f32[16,64], index: 9, kind: output, shape index: {}]
  %s10 = sld [smem:[#allocation0]]
  $region89: #{attention_forward.1} parent=0
    _
  %s12 = ssub.s32 1, %s10
  %s13 = scalar_select 0, %s12, %s10
  $region1: #{attention_forward.1} parent=0
    #allocation4 [shape = 'u8[8192]{0}', space=vmem, size = 0x2000, scoped, tag = 'input window, operand 5, single buffered']
    #allocation5 [shape = 's32[2]{0}', space=sflag, size = 0x8, scoped, tag = 'scoped memory for attention_forward.1']
    #allocation6 [shape = 'u8[131072]{0}', space=vmem, size = 0x20000, scoped, tag = 'input window, operand 6']
    #allocation7 [shape = 's32[2]{0}', space=sflag, size = 0x8, scoped, tag = 'scoped memory for attention_forward.1']
    #allocation8 [shape = 'u8[131072]{0}', space=vmem, size = 0x20000, scoped, tag = 'input window, operand 8']
    %14 = vsyncpa [#allocation5], 0
    %15 = vsyncpa [#allocation7], 0
    %s16 = scalar_lea.sflag [#allocation7], 1
    %17 = vsyncpa %s16, 0
    loop: start=0, step=1, limit=4
    $region2: #{attention_forward.1} parent=1 // loop_pre_header
      _
    $region3: #{attention_forward.1} parent=1 // loop_header
      %s19 = sphi 0, %s23
      %p20 = scmp.ge.s32.totalorder %s19, 4
      %s27 = sphi 0, %s27
      %s29 = sphi 0, %s27
      %s30 = sphi 0, %s29
      %s44 = sphi 0, %s30
      %s48 = sphi 0, %s48
      %s50 = sphi 0, %s48
      %s51 = sphi 0, %s50
      %s65 = sphi 0, %s51
      %s69 = sphi 0, %s69
      %s71 = sphi 0, %s69
      %s72 = sphi 0, %s71
      %s86 = sphi 0, %s72
      %s90 = sphi 0, %s90
      %s92 = sphi 0, %s90
      %s93 = sphi 0, %s92
      %s107 = sphi 0, %s93
      %s111 = sphi 0, %s111
      %s113 = sphi 0, %s111
      %s114 = sphi 0, %s113
      %s128 = sphi 0, %s114
      %s132 = sphi 0, %s132
      %s134 = sphi 0, %s132
      %s135 = sphi 0, %s134
      %s149 = sphi 0, %s135
      %s155 = sphi 0, %s157
      %s158 = sphi 0, %s155
      %s159 = sphi 0, %s158
      %s175 = sphi 0, %s159
      %s181 = sphi 0, %s183
      %s184 = sphi 0, %s181
      %s185 = sphi 0, %s184
      %s201 = sphi 0, %s185
      %s207 = sphi 0, %s209
      %s210 = sphi 0, %s207
      %s211 = sphi 0, %s210
      %s227 = sphi 0, %s211
      %s231 = sphi 0, %s231
      %s233 = sphi 0, %s231
      %s234 = sphi 0, %s233
      %s248 = sphi 0, %s234
    $region4: #{attention_forward.1} parent=1 // loop_header_branch
      %22 = sbr.rel (%p20) target = $region8
    $region5: #{attention_forward.1} parent=1 // loop_body
      %s24 = ssub.s32 %s19, 1
      %s25 = ssub.s32 %s19, 2
      %s26 = sadd.s32 %s19, 1
      %s28 = sadd.s32 %s27, 1
      %p31 = scmp.eq.s32.totalorder %s19, 1
      %p32 = scmp.ne.s32.totalorder %s27, %s29
      %p33 = scmp.eq.s32.totalorder %s19, 0
      %p34 = por %p32, %p33
      %p35 = scmp.ne.s32.totalorder %s27, %s29
      %p36 = scmp.eq.s32.totalorder %s24, 1
      %p37 = por %p35, %p36
      %p38 = scmp.ne.s32.totalorder %s29, %s30
      %p39 = scmp.eq.s32.totalorder %s24, 0
      %p40 = por %p38, %p39
      %p41 = scmp.ne.s32.totalorder %s29, %s30
      %p42 = scmp.eq.s32.totalorder %s25, 1
      %p43 = por %p41, %p42
      %p45 = scmp.ne.s32.totalorder %s30, %s44
      %p46 = scmp.eq.s32.totalorder %s25, 0
      %p47 = por %p45, %p46
      %s49 = sadd.s32 %s48, 1
      %p52 = scmp.eq.s32.totalorder %s19, 1
      %p53 = scmp.ne.s32.totalorder %s48, %s50
      %p54 = scmp.eq.s32.totalorder %s19, 0
      %p55 = por %p53, %p54
      %p56 = scmp.ne.s32.totalorder %s48, %s50
      %p57 = scmp.eq.s32.totalorder %s24, 1
      %p58 = por %p56, %p57
      %p59 = scmp.ne.s32.totalorder %s50, %s51
      %p60 = scmp.eq.s32.totalorder %s24, 0
      %p61 = por %p59, %p60
      %p62 = scmp.ne.s32.totalorder %s50, %s51
      %p63 = scmp.eq.s32.totalorder %s25, 1
      %p64 = por %p62, %p63
      %p66 = scmp.ne.s32.totalorder %s51, %s65
      %p67 = scmp.eq.s32.totalorder %s25, 0
      %p68 = por %p66, %p67
      %s70 = sadd.s32 %s69, 1
      %p73 = scmp.eq.s32.totalorder %s19, 1
      %p74 = scmp.ne.s32.totalorder %s69, %s71
      %p75 = scmp.eq.s32.totalorder %s19, 0
      %p76 = por %p74, %p75
      %p77 = scmp.ne.s32.totalorder %s69, %s71
      %p78 = scmp.eq.s32.totalorder %s24, 1
      %p79 = por %p77, %p78
      %p80 = scmp.ne.s32.totalorder %s71, %s72
      %p81 = scmp.eq.s32.totalorder %s24, 0
      %p82 = por %p80, %p81
      %p83 = scmp.ne.s32.totalorder %s71, %s72
      %p84 = scmp.eq.s32.totalorder %s25, 1
      %p85 = por %p83, %p84
      %p87 = scmp.ne.s32.totalorder %s72, %s86
      %p88 = scmp.eq.s32.totalorder %s25, 0
      %p89 = por %p87, %p88
      %s91 = sadd.s32 %s90, 1
      %p94 = scmp.eq.s32.totalorder %s19, 1
      %p95 = scmp.ne.s32.totalorder %s90, %s92
      %p96 = scmp.eq.s32.totalorder %s19, 0
      %p97 = por %p95, %p96
      %p98 = scmp.ne.s32.totalorder %s90, %s92
      %p99 = scmp.eq.s32.totalorder %s24, 1
      %p100 = por %p98, %p99
      %p101 = scmp.ne.s32.totalorder %s92, %s93
      %p102 = scmp.eq.s32.totalorder %s24, 0
      %p103 = por %p101, %p102
      %p104 = scmp.ne.s32.totalorder %s92, %s93
      %p105 = scmp.eq.s32.totalorder %s25, 1
      %p106 = por %p104, %p105
      %p108 = scmp.ne.s32.totalorder %s93, %s107
      %p109 = scmp.eq.s32.totalorder %s25, 0
      %p110 = por %p108, %p109
      %s112 = sadd.s32 %s111, 1
      %p115 = scmp.eq.s32.totalorder %s19, 1
      %p116 = scmp.ne.s32.totalorder %s111, %s113
      %p117 = scmp.eq.s32.totalorder %s19, 0
      %p118 = por %p116, %p117
      %p119 = scmp.ne.s32.totalorder %s111, %s113
      %p120 = scmp.eq.s32.totalorder %s24, 1
      %p121 = por %p119, %p120
      %p122 = scmp.ne.s32.totalorder %s113, %s114
      %p123 = scmp.eq.s32.totalorder %s24, 0
      %p124 = por %p122, %p123
      %p125 = scmp.ne.s32.totalorder %s113, %s114
      %p126 = scmp.eq.s32.totalorder %s25, 1
      %p127 = por %p125, %p126
      %p129 = scmp.ne.s32.totalorder %s114, %s128
      %p130 = scmp.eq.s32.totalorder %s25, 0
      %p131 = por %p129, %p130
      %s133 = sadd.s32 %s132, 1
      %p136 = scmp.eq.s32.totalorder %s19, 1
      %p137 = scmp.ne.s32.totalorder %s132, %s134
      %p138 = scmp.eq.s32.totalorder %s19, 0
      %p139 = por %p137, %p138
      %p140 = scmp.ne.s32.totalorder %s132, %s134
      %p141 = scmp.eq.s32.totalorder %s24, 1
      %p142 = por %p140, %p141
      %p143 = scmp.ne.s32.totalorder %s134, %s135
      %p144 = scmp.eq.s32.totalorder %s24, 0
      %p145 = por %p143, %p144
      %p146 = scmp.ne.s32.totalorder %s134, %s135
      %p147 = scmp.eq.s32.totalorder %s25, 1
      %p148 = por %p146, %p147
      %p150 = scmp.ne.s32.totalorder %s135, %s149
      %p151 = scmp.eq.s32.totalorder %s25, 0
      %p152 = por %p150, %p151
      %s153 = ssub.s32 %s19, %s26
      %p154 = scmp.eq.s32.totalorder %s153, 0
      %s156 = sadd.s32 %s155, 1
      %s157 = scalar_select %p154, %s155, %s156
      %p160 = pneg %p154
      %p161 = scmp.eq.s32.totalorder %s19, 1
      %p162 = por %p160, %p161
      %p163 = scmp.ne.s32.totalorder %s155, %s158
      %p164 = scmp.eq.s32.totalorder %s19, 0
      %p165 = por %p163, %p164
      %p166 = scmp.ne.s32.totalorder %s155, %s158
      %p167 = scmp.eq.s32.totalorder %s24, 1
      %p168 = por %p166, %p167
      %p169 = scmp.ne.s32.totalorder %s158, %s159
      %p170 = scmp.eq.s32.totalorder %s24, 0
      %p171 = por %p169, %p170
      %p172 = scmp.ne.s32.totalorder %s158, %s159
      %p173 = scmp.eq.s32.totalorder %s25, 1
      %p174 = por %p172, %p173
      %p176 = scmp.ne.s32.totalorder %s159, %s175
      %p177 = scmp.eq.s32.totalorder %s25, 0
      %p178 = por %p176, %p177
      %s179 = ssub.s32 %s19, %s26
      %p180 = scmp.eq.s32.totalorder %s179, 0
      %s182 = sadd.s32 %s181, 1
      %s183 = scalar_select %p180, %s181, %s182
      %p186 = pneg %p180
      %p187 = scmp.eq.s32.totalorder %s19, 1
      %p188 = por %p186, %p187
      %p189 = scmp.ne.s32.totalorder %s181, %s184
      %p190 = scmp.eq.s32.totalorder %s19, 0
      %p191 = por %p189, %p190
      %p192 = scmp.ne.s32.totalorder %s181, %s184
      %p193 = scmp.eq.s32.totalorder %s24, 1
      %p194 = por %p192, %p193
      %p195 = scmp.ne.s32.totalorder %s184, %s185
      %p196 = scmp.eq.s32.totalorder %s24, 0
      %p197 = por %p195, %p196
      %p198 = scmp.ne.s32.totalorder %s184, %s185
      %p199 = scmp.eq.s32.totalorder %s25, 1
      %p200 = por %p198, %p199
      %p202 = scmp.ne.s32.totalorder %s185, %s201
      %p203 = scmp.eq.s32.totalorder %s25, 0
      %p204 = por %p202, %p203
      %s205 = ssub.s32 %s19, %s26
      %p206 = scmp.eq.s32.totalorder %s205, 0
      %s208 = sadd.s32 %s207, 1
      %s209 = scalar_select %p206, %s207, %s208
      %p212 = pneg %p206
      %p213 = scmp.eq.s32.totalorder %s19, 1
      %p214 = por %p212, %p213
      %p215 = scmp.ne.s32.totalorder %s207, %s210
      %p216 = scmp.eq.s32.totalorder %s19, 0
      %p217 = por %p215, %p216
      %p218 = scmp.ne.s32.totalorder %s207, %s210
      %p219 = scmp.eq.s32.totalorder %s24, 1
      %p220 = por %p218, %p219
      %p221 = scmp.ne.s32.totalorder %s210, %s211
      %p222 = scmp.eq.s32.totalorder %s24, 0
      %p223 = por %p221, %p222
      %p224 = scmp.ne.s32.totalorder %s210, %s211
      %p225 = scmp.eq.s32.totalorder %s25, 1
      %p226 = por %p224, %p225
      %p228 = scmp.ne.s32.totalorder %s211, %s227
      %p229 = scmp.eq.s32.totalorder %s25, 0
      %p230 = por %p228, %p229
      %s232 = sadd.s32 %s231, 1
      %p235 = scmp.eq.s32.totalorder %s19, 1
      %p236 = scmp.ne.s32.totalorder %s231, %s233
      %p237 = scmp.eq.s32.totalorder %s19, 0
      %p238 = por %p236, %p237
      %p239 = scmp.ne.s32.totalorder %s231, %s233
      %p240 = scmp.eq.s32.totalorder %s24, 1
      %p241 = por %p239, %p240
      %p242 = scmp.ne.s32.totalorder %s233, %s234
      %p243 = scmp.eq.s32.totalorder %s24, 0
      %p244 = por %p242, %p243
      %p245 = scmp.ne.s32.totalorder %s233, %s234
      %p246 = scmp.eq.s32.totalorder %s25, 1
      %p247 = por %p245, %p246
      %p249 = scmp.ne.s32.totalorder %s234, %s248
      %p250 = scmp.eq.s32.totalorder %s25, 0
      %p251 = por %p249, %p250
      %p252 = scmp.le.s32.totalorder 1, %s19
      %p253 = scmp.lt.s32.totalorder %s19, 3
      %p254 = pnand %p252, %p253
      %p255 = pneg %p254
      // Predicated region
      $region9: #{attention_forward.1} parent=5 // pred_check
        _
      $region10: #{attention_forward.1} parent=5 // pred_check_branch
        %257 = sbr.rel (%p254) target = $region12
      $region11: #{attention_forward.1} parent=5 // pred_region
        %s258 = ssub.s32 %s19, 1
        // Predicated region
        $region13: #{attention_forward.1} parent=11 // pred_check
          %p259 = pneg %p40
        $region14: #{attention_forward.1} parent=11 // pred_check_branch
          %261 = sbr.rel (%p259) target = $region16
        $region15: #{attention_forward.1} parent=11 // pred_region
          _
        $region16: #{attention_forward.1} parent=11 // pred_fallthru
          _
        // Predicated region
        $region17: #{attention_forward.1} parent=11 // pred_check
          %p262 = pneg %p61
        $region18: #{attention_forward.1} parent=11 // pred_check_branch
          %264 = sbr.rel (%p262) target = $region20
        $region19: #{attention_forward.1} parent=11 // pred_region
          _
        $region20: #{attention_forward.1} parent=11 // pred_fallthru
          _
        // Predicated region
        $region21: #{attention_forward.1} parent=11 // pred_check
          %p265 = pneg %p82
        $region22: #{attention_forward.1} parent=11 // pred_check_branch
          %267 = sbr.rel (%p265) target = $region24
        $region23: #{attention_forward.1} parent=11 // pred_region
          _
        $region24: #{attention_forward.1} parent=11 // pred_fallthru
          _
        // Predicated region
        $region25: #{attention_forward.1} parent=11 // pred_check
          %p268 = pneg %p103
        $region26: #{attention_forward.1} parent=11 // pred_check_branch
          %270 = sbr.rel (%p268) target = $region28
        $region27: #{attention_forward.1} parent=11 // pred_region
          _
        $region28: #{attention_forward.1} parent=11 // pred_fallthru
          _
        // Predicated region
        $region29: #{attention_forward.1} parent=11 // pred_check
          %p271 = pneg %p124
        $region30: #{attention_forward.1} parent=11 // pred_check_branch
          %273 = sbr.rel (%p271) target = $region32
        $region31: #{attention_forward.1} parent=11 // pred_region
          _
        $region32: #{attention_forward.1} parent=11 // pred_fallthru
          _
        // Predicated region
        $region33: #{attention_forward.1} parent=11 // pred_check
          %p274 = pneg %p145
        $region34: #{attention_forward.1} parent=11 // pred_check_branch
          %276 = sbr.rel (%p274) target = $region36
        $region35: #{attention_forward.1} parent=11 // pred_region
          %s278 = ssub.s32 256, 256
          %279 = vsyncadd [#allocation5], %s278
          %s280 = sshll.u32 [#allocation4], 4
          %s281 = int_to_ptr.vmem [resolvable:$true] %s280
          %286 = dma.hbm_to_vmem [thread:$0]  %s5, 256, %s281, [#allocation5], 128, 128, 8
        $region36: #{attention_forward.1} parent=11 // pred_fallthru
          _
      $region12: #{attention_forward.1} parent=5 // pred_fallthru
        _
      %p287 = scmp.lt.s32.totalorder %s19, 2
      // Predicated region
      $region37: #{attention_forward.1} parent=5 // pred_check
        %p288 = pneg %p287
      $region38: #{attention_forward.1} parent=5 // pred_check_branch
        %290 = sbr.rel (%p288) target = $region40
      $region39: #{attention_forward.1} parent=5 // pred_region
        // Predicated region
        $region41: #{attention_forward.1} parent=39 // pred_check
          %p291 = pneg %p165
        $region42: #{attention_forward.1} parent=39 // pred_check_branch
          %293 = sbr.rel (%p291) target = $region44
        $region43: #{attention_forward.1} parent=39 // pred_region
          %s294 = sand.u32 %s19, 1
          %s295 = scalar_lea.sflag [#allocation7], %s294
          %s296 = sand.u32 %s155, 1
          %s297 = smul.addr %s296, 128
          %s298 = scalar_lea.vmem [#allocation6], %s297
          %s299 = smul.u32 4, %s19
          %s301 = ssub.s32 2048, 2048
          %302 = vsyncadd %s295, %s301
          %s303 = smul.addr %s299, 64
          %s304 = scalar_lea.hbm %s6, %s303
          %s305 = sshll.u32 %s298, 4
          %s306 = int_to_ptr.vmem [resolvable:$true] %s305
          %311 = dma.hbm_to_vmem [thread:$0]  %s304, 2048, %s306, %s295, 512, 256, 16
        $region44: #{attention_forward.1} parent=39 // pred_fallthru
          _
        // Predicated region
        $region45: #{attention_forward.1} parent=39 // pred_check
          %p312 = pneg %p191
        $region46: #{attention_forward.1} parent=39 // pred_check_branch
          %314 = sbr.rel (%p312) target = $region48
        $region47: #{attention_forward.1} parent=39 // pred_region
          %s315 = smul.u32 4, %s19
          %p316 = scmp.lt.s32.totalorder %s315, 7
          %s317 = scalar_select %p316, %s315, 7
          %s318 = scalar_lea.vmem %s7, %s317
          %s319 = smul.u32 4, %s19
        $region48: #{attention_forward.1} parent=39 // pred_fallthru
          _
        // Predicated region
        $region49: #{attention_forward.1} parent=39 // pred_check
          %p320 = pneg %p217
        $region50: #{attention_forward.1} parent=39 // pred_check_branch
          %322 = sbr.rel (%p320) target = $region52
        $region51: #{attention_forward.1} parent=39 // pred_region
          %s323 = sand.u32 %s19, 1
          %s324 = scalar_lea.sflag [#allocation7], %s323
          %s325 = sand.u32 %s207, 1
          %s326 = smul.addr %s325, 128
          %s327 = scalar_lea.vmem [#allocation8], %s326
          %s328 = smul.u32 4, %s19
          %s330 = ssub.s32 2048, 2048
          %331 = vsyncadd %s324, %s330
          %s332 = smul.addr %s328, 64
          %s333 = scalar_lea.hbm %s8, %s332
          %s334 = sshll.u32 %s327, 4
          %s335 = int_to_ptr.vmem [resolvable:$true] %s334
          %340 = dma.hbm_to_vmem [thread:$0]  %s333, 2048, %s335, %s324, 512, 256, 16
        $region52: #{attention_forward.1} parent=39 // pred_fallthru
          _
      $region40: #{attention_forward.1} parent=5 // pred_fallthru
        _
      %p341 = scmp.le.s32.totalorder 1, %s19
      %p342 = scmp.lt.s32.totalorder %s19, 3
      %p343 = pnand %p341, %p342
      %p344 = pneg %p343
      // Predicated region
      $region53: #{attention_forward.1} parent=5 // pred_check
        _
      $region54: #{attention_forward.1} parent=5 // pred_check_branch
        %346 = sbr.rel (%p343) target = $region56
      $region55: #{attention_forward.1} parent=5 // pred_region
        %s347 = ssub.s32 %s19, 1
        // Predicated region
        $region57: #{attention_forward.1} parent=55 // pred_check
          %p348 = pneg %p145
        $region58: #{attention_forward.1} parent=55 // pred_check_branch
          %350 = sbr.rel (%p348) target = $region60
        $region59: #{attention_forward.1} parent=55 // pred_region
          %351 = dma.done [#allocation5], 256
        $region60: #{attention_forward.1} parent=55 // pred_fallthru
          _
        %s352 = sand.u32 %s24, 1
        %s353 = scalar_lea.sflag [#allocation7], %s352
        %s354 = sand.u32 %s158, 1
        %s355 = smul.addr %s354, 128
        %s356 = scalar_lea.vmem [#allocation6], %s355
        // Predicated region
        $region61: #{attention_forward.1} parent=55 // pred_check
          %p357 = pneg %p171
        $region62: #{attention_forward.1} parent=55 // pred_check_branch
          %359 = sbr.rel (%p357) target = $region64
        $region63: #{attention_forward.1} parent=55 // pred_region
          %360 = dma.done %s353, 2048
        $region64: #{attention_forward.1} parent=55 // pred_fallthru
          _
        %s361 = sand.u32 %s24, 1
        %s362 = scalar_lea.sflag [#allocation7], %s361
        %s363 = sand.u32 %s210, 1
        %s364 = smul.addr %s363, 128
        %s365 = scalar_lea.vmem [#allocation8], %s364
        // Predicated region
        $region65: #{attention_forward.1} parent=55 // pred_check
          %p366 = pneg %p223
        $region66: #{attention_forward.1} parent=55 // pred_check_branch
          %368 = sbr.rel (%p366) target = $region68
        $region67: #{attention_forward.1} parent=55 // pred_region
          %369 = dma.done %s362, 2048
        $region68: #{attention_forward.1} parent=55 // pred_fallthru
          _
        %p370 = pneg %p40
        %p371 = pneg %p37
        %p372 = pneg %p61
        %p373 = pneg %p58
        %p374 = pneg %p82
        %p375 = pneg %p79
        %p376 = pneg %p103
        %p377 = pneg %p100
        %p378 = pneg %p124
        %p379 = pneg %p121
        %p380 = pneg %p145
        %p381 = pneg %p142
        %s382 = sand.u32 %s24, 1
        %s383 = scalar_lea.sflag [#allocation7], %s382
        %s384 = sand.u32 %s158, 1
        %s385 = smul.addr %s384, 128
        %s386 = scalar_lea.vmem [#allocation6], %s385
        %p387 = pneg %p171
        %p388 = pneg %p168
        %s389 = smul.u32 4, %s24
        %p390 = scmp.lt.s32.totalorder %s389, 7
        %s391 = scalar_select %p390, %s389, 7
        %s392 = scalar_lea.vmem %s7, %s391
        %p393 = pneg %p197
        %p394 = pneg %p194
        %s395 = sand.u32 %s24, 1
        %s396 = scalar_lea.sflag [#allocation7], %s395
        %s397 = sand.u32 %s210, 1
        %s398 = smul.addr %s397, 128
        %s399 = scalar_lea.vmem [#allocation8], %s398
        %p400 = pneg %p223
        %p401 = pneg %p220
        %p402 = pneg %p244
        %p403 = pneg %p241
        %s404 = smul.u32 4, %s24
        %s405 = smul.u32 4, %s24
        %p406 = scmp.lt.s32.totalorder %s405, 7
        %s407 = scalar_select %p406, %s405, 7
        %s408 = scalar_lea.vmem %s7, %s407
        %s409 = smul.u32 4, %s24
        %s410 = smul.u32 4, %s24
        %p412 = scmp.eq.s32.totalorder %s24, 0
        // Predicated region
        $region69: #{attention_forward.1} parent=55 // pred_check
          %p413 = pneg %p412
        $region70: #{attention_forward.1} parent=55 // pred_check_branch
          %415 = sbr.rel (%p413) target = $region72
        $region71: #{attention_forward.1} parent=55 // pred_region
          %v416 = vld [vmem:[%s0] sm:$0xff]
          %v417 = vld [vmem:[%s0 + $0x8] sm:$0xff]
          %v418 = vpack.c.bf16 %v417, %v416
          %v419 = vld [vmem:[%s3] sm:$0xf]
          %v420 = vld [vmem:[%s3 + $0x4] sm:$0xf]
          %v421 = vld [vmem:[%s3 + $0x8] sm:$0xf]
          %v422 = vld [vmem:[%s3 + $0xc] sm:$0xf]
          %v423 = vld [vmem:[%s3 + $0x10] sm:$0xf]
          %v424 = vld [vmem:[%s3 + $0x14] sm:$0xf]
          %v425 = vld [vmem:[%s3 + $0x18] sm:$0xf]
          %v426 = vld [vmem:[%s3 + $0x1c] sm:$0xf]
          %v427 = vld [vmem:[#allocation4] sm:$0x1]
          %v428 = vlaneseq
          %v429 = vshrl.u32 %v428, 7
          %v430 = vsub.s32 0, %v429
          %v431 = vrot.slane %v427, %v430
          %v440 = vunpack.c.l.b16 %v419
          %v441 = vunpack.c.l.b16 %v420
          %v442 = vunpack.c.l.b16 %v421
          %v443 = vunpack.c.l.b16 %v422
          %v444 = vunpack.c.l.b16 %v423
          %v445 = vunpack.c.l.b16 %v424
          %v446 = vunpack.c.l.b16 %v425
          %v447 = vunpack.c.l.b16 %v426
          %v448 = vpack.c.b16 %v441, %v440
          %v449 = vpack.c.b16 %v443, %v442
          %v450 = vpack.c.b16 %v445, %v444
          %v451 = vpack.c.b16 %v447, %v446
          %vm456 = vcmask 523264
          %v458 = vsel %vm456, %v418, 0
          %460 = vmatprep.subr.bf16.mxu0 0
          %461 = vmatpush1.bf16.msra.mxu0 %v448
          %462 = vmatprep.subr.bf16.mxu0 0
          %463 = vmatpush1.bf16.msra.mxu0 %v449
          %464 = vmatprep.subr.bf16.mxu0 0
          %465 = vmatpush1.bf16.msra.mxu0 %v450
          %466 = vmatprep.subr.bf16.mxu0 0
          %467 = vmatpush1.bf16.msra.mxu0 %v451
          %468 = vmatprep.subr.bf16.mxu0 0
          %469 = vmatpush1.bf16.msra.mxu0 0
          %470 = vmatprep.subr.bf16.mxu0 0
          %471 = vmatpush1.bf16.msra.mxu0 0
          %472 = vmatprep.subr.bf16.mxu0 0
          %473 = vmatpush1.bf16.msra.mxu0 0
          %474 = vmatprep.subr.bf16.mxu0 0
          %475 = vmatpush1.bf16.msra.mxu0 0
          %476 = vmatprep.subr.bf16.mxu0 0
          %477 = vmatpush1.bf16.msra.mxu0 0
          %478 = vmatprep.subr.bf16.mxu0 0
          %479 = vmatpush1.bf16.msra.mxu0 0
          %480 = vmatprep.subr.bf16.mxu0 0
          %481 = vmatpush1.bf16.msra.mxu0 0
          %482 = vmatprep.subr.bf16.mxu0 0
          %483 = vmatpush1.bf16.msra.mxu0 0
          %484 = vmatprep.subr.bf16.mxu0 0
          %485 = vmatpush1.bf16.msra.mxu0 0
          %486 = vmatprep.subr.bf16.mxu0 0
          %487 = vmatpush1.bf16.msra.mxu0 0
          %488 = vmatprep.subr.bf16.mxu0 0
          %489 = vmatpush1.bf16.msra.mxu0 0
          %490 = vmatprep.subr.bf16.mxu0 0
          %491 = vmatpush1.bf16.msra.mxu0 0
          %492 = vmatprep.mubr.bf16.mxu0 0
          %493 = vmatmul.mubr.bf16.gmra.mrb[0].mxu0 %v458
          %v494 = vpop.f32.mrb[0].mxu0
          %v495 = vadd.f32 %v431, %v494
          %v496 = vpop.f32.mrb[0].mxu0
          %v497 = vpop.f32.mrb[0].mxu0
          %v498 = vadd.f32 %v431, %v497
          %v499 = vpop.f32.mrb[0].mxu0
          %500 = vdwg.mxu0
          %v501 = vld [vmem:[%s1] sm:$0xff]
          %v502 = vld [vmem:[%s1 + $0x8] sm:$0xff]
          %v503 = vpack.c.bf16 %v502, %v501
          %s504 = scalar_lea.vmem %s3, 32
          %v505 = vld [vmem:[%s504] sm:$0xf]
          %v506 = vld [vmem:[%s504 + $0x4] sm:$0xf]
          %v507 = vld [vmem:[%s504 + $0x8] sm:$0xf]
          %v508 = vld [vmem:[%s504 + $0xc] sm:$0xf]
          %v509 = vld [vmem:[%s504 + $0x10] sm:$0xf]
          %v510 = vld [vmem:[%s504 + $0x14] sm:$0xf]
          %v511 = vld [vmem:[%s504 + $0x18] sm:$0xf]
          %v512 = vld [vmem:[%s504 + $0x1c] sm:$0xf]
          %v513 = vld [vmem:[#allocation4 + $0x1] sm:$0x1]
          %v514 = vlaneseq
          %v515 = vshrl.u32 %v514, 7
          %v516 = vsub.s32 0, %v515
          %v517 = vrot.slane %v513, %v516
          %v526 = vunpack.c.l.b16 %v505
          %v527 = vunpack.c.l.b16 %v506
          %v528 = vunpack.c.l.b16 %v507
          %v529 = vunpack.c.l.b16 %v508
          %v530 = vunpack.c.l.b16 %v509
          %v531 = vunpack.c.l.b16 %v510
          %v532 = vunpack.c.l.b16 %v511
          %v533 = vunpack.c.l.b16 %v512
          %v534 = vpack.c.b16 %v527, %v526
          %v535 = vpack.c.b16 %v529, %v528
          %v536 = vpack.c.b16 %v531, %v530
          %v537 = vpack.c.b16 %v533, %v532
          %v543 = vsel %vm456, %v503, 0
          %545 = vmatprep.subr.bf16.mxu0 0
          %546 = vmatpush1.bf16.msra.mxu0 %v534
          %547 = vmatprep.subr.bf16.mxu0 0
          %548 = vmatpush1.bf16.msra.mxu0 %v535
          %549 = vmatprep.subr.bf16.mxu0 0
          %550 = vmatpush1.bf16.msra.mxu0 %v536
          %551 = vmatprep.subr.bf16.mxu0 0
          %552 = vmatpush1.bf16.msra.mxu0 %v537
          %553 = vmatprep.subr.bf16.mxu0 0
          %554 = vmatpush1.bf16.msra.mxu0 0
          %555 = vmatprep.subr.bf16.mxu0 0
          %556 = vmatpush1.bf16.msra.mxu0 0
          %557 = vmatprep.subr.bf16.mxu0 0
          %558 = vmatpush1.bf16.msra.mxu0 0
          %559 = vmatprep.subr.bf16.mxu0 0
          %560 = vmatpush1.bf16.msra.mxu0 0
          %561 = vmatprep.subr.bf16.mxu0 0
          %562 = vmatpush1.bf16.msra.mxu0 0
          %563 = vmatprep.subr.bf16.mxu0 0
          %564 = vmatpush1.bf16.msra.mxu0 0
          %565 = vmatprep.subr.bf16.mxu0 0
          %566 = vmatpush1.bf16.msra.mxu0 0
          %567 = vmatprep.subr.bf16.mxu0 0
          %568 = vmatpush1.bf16.msra.mxu0 0
          %569 = vmatprep.subr.bf16.mxu0 0
          %570 = vmatpush1.bf16.msra.mxu0 0
          %571 = vmatprep.subr.bf16.mxu0 0
          %572 = vmatpush1.bf16.msra.mxu0 0
          %573 = vmatprep.subr.bf16.mxu0 0
          %574 = vmatpush1.bf16.msra.mxu0 0
          %575 = vmatprep.subr.bf16.mxu0 0
          %576 = vmatpush1.bf16.msra.mxu0 0
          %577 = vmatprep.mubr.bf16.mxu0 0
          %578 = vmatmul.mubr.bf16.gmra.mrb[0].mxu0 %v543
          %v579 = vpop.f32.mrb[0].mxu0
          %v580 = vadd.f32 %v517, %v579
          %v581 = vpop.f32.mrb[0].mxu0
          %v582 = vpop.f32.mrb[0].mxu0
          %v583 = vadd.f32 %v517, %v582
          %v584 = vpop.f32.mrb[0].mxu0
          %585 = vdwg.mxu0
          %v586 = vld [vmem:[%s2] sm:$0xff]
          %v587 = vld [vmem:[%s2 + $0x8] sm:$0xff]
          %v588 = vpack.c.bf16 %v587, %v586
          %s589 = scalar_lea.vmem %s3, 64
          %v590 = vld [vmem:[%s589] sm:$0xf]
          %v591 = vld [vmem:[%s589 + $0x4] sm:$0xf]
          %v592 = vld [vmem:[%s589 + $0x8] sm:$0xf]
          %v593 = vld [vmem:[%s589 + $0xc] sm:$0xf]
          %v594 = vld [vmem:[%s589 + $0x10] sm:$0xf]
          %v595 = vld [vmem:[%s589 + $0x14] sm:$0xf]
          %v596 = vld [vmem:[%s589 + $0x18] sm:$0xf]
          %v597 = vld [vmem:[%s589 + $0x1c] sm:$0xf]
          %v598 = vld [vmem:[#allocation4 + $0x2] sm:$0x1]
          %v599 = vlaneseq
          %v600 = vshrl.u32 %v599, 7
          %v601 = vsub.s32 0, %v600
          %v602 = vrot.slane %v598, %v601
          %v611 = vunpack.c.l.b16 %v590
          %v612 = vunpack.c.l.b16 %v591
          %v613 = vunpack.c.l.b16 %v592
          %v614 = vunpack.c.l.b16 %v593
          %v615 = vunpack.c.l.b16 %v594
          %v616 = vunpack.c.l.b16 %v595
          %v617 = vunpack.c.l.b16 %v596
          %v618 = vunpack.c.l.b16 %v597
          %v619 = vpack.c.b16 %v612, %v611
          %v620 = vpack.c.b16 %v614, %v613
          %v621 = vpack.c.b16 %v616, %v615
          %v622 = vpack.c.b16 %v618, %v617
          %v628 = vsel %vm456, %v588, 0
          %630 = vmatprep.subr.bf16.mxu0 0
          %631 = vmatpush1.bf16.msra.mxu0 %v619
          %632 = vmatprep.subr.bf16.mxu0 0
          %633 = vmatpush1.bf16.msra.mxu0 %v620
          %634 = vmatprep.subr.bf16.mxu0 0
          %635 = vmatpush1.bf16.msra.mxu0 %v621
          %636 = vmatprep.subr.bf16.mxu0 0
          %637 = vmatpush1.bf16.msra.mxu0 %v622
          %638 = vmatprep.subr.bf16.mxu0 0
          %639 = vmatpush1.bf16.msra.mxu0 0
          %640 = vmatprep.subr.bf16.mxu0 0
          %641 = vmatpush1.bf16.msra.mxu0 0
          %642 = vmatprep.subr.bf16.mxu0 0
          %643 = vmatpush1.bf16.msra.mxu0 0
          %644 = vmatprep.subr.bf16.mxu0 0
          %645 = vmatpush1.bf16.msra.mxu0 0
          %646 = vmatprep.subr.bf16.mxu0 0
          %647 = vmatpush1.bf16.msra.mxu0 0
          %648 = vmatprep.subr.bf16.mxu0 0
          %649 = vmatpush1.bf16.msra.mxu0 0
          %650 = vmatprep.subr.bf16.mxu0 0
          %651 = vmatpush1.bf16.msra.mxu0 0
          %652 = vmatprep.subr.bf16.mxu0 0
          %653 = vmatpush1.bf16.msra.mxu0 0
          %654 = vmatprep.subr.bf16.mxu0 0
          %655 = vmatpush1.bf16.msra.mxu0 0
          %656 = vmatprep.subr.bf16.mxu0 0
          %657 = vmatpush1.bf16.msra.mxu0 0
          %658 = vmatprep.subr.bf16.mxu0 0
          %659 = vmatpush1.bf16.msra.mxu0 0
          %660 = vmatprep.subr.bf16.mxu0 0
          %661 = vmatpush1.bf16.msra.mxu0 0
          %662 = vmatprep.mubr.bf16.mxu0 0
          %663 = vmatmul.mubr.bf16.gmra.mrb[0].mxu0 %v628
          %v664 = vpop.f32.mrb[0].mxu0
          %v665 = vadd.f32 %v602, %v664
          %v666 = vpop.f32.mrb[0].mxu0
          %v667 = vpop.f32.mrb[0].mxu0
          %v668 = vadd.f32 %v602, %v667
          %v669 = vpop.f32.mrb[0].mxu0
          %670 = vdwg.mxu0
          %v671 = vlaneseq
          %v672 = vshrl.u32 %v671, 7
          %v673 = vadd.s32 %v672, 8
          %v674 = vlaneseq
          %v675 = vand.u32 %v674, 127
          %vm676 = vcmp.ge.s32.totalorder %v672, 0
          %vm677 = vcmp.ge.s32.totalorder %v673, 0
          %vm678 = vcmp.lt.s32.totalorder %v672, 8
          %vm679 = vcmp.lt.s32.totalorder %v673, 8
          %vm680 = vmand %vm676, %vm678
          %vm681 = vmand %vm677, %vm679
          %vm682 = vcmp.ge.s32.totalorder %v675, 0
          %vm683 = vmand %vm680, %vm682
          %vm684 = vmand %vm681, %vm682
          %vm685 = vcmp.lt.s32.totalorder %v675, 8
          %vm686 = vmand %vm683, %vm685
          %vm687 = vmand %vm684, %vm685
          %vm688 = vcmp.ge.s32.totalorder %v672, 8
          %vm689 = vcmp.ge.s32.totalorder %v673, 8
          %vm690 = vcmp.lt.s32.totalorder %v672, 16
          %vm691 = vcmp.lt.s32.totalorder %v673, 16
          %vm692 = vmand %vm688, %vm690
          %vm693 = vmand %vm689, %vm691
          %vm694 = vcmp.ge.s32.totalorder %v675, 8
          %vm695 = vmand %vm692, %vm694
          %vm696 = vmand %vm693, %vm694
          %vm697 = vcmp.lt.s32.totalorder %v675, 16
          %vm698 = vmand %vm695, %vm697
          %vm699 = vmand %vm696, %vm697
          %vm700 = vmor %vm686, %vm698
          %vm701 = vmor %vm687, %vm699
          %v702 = vsel %vm700, 0.0, -1e+30
          %v703 = vsel %vm701, 0.0, -1e+30
          %v704 = vpack.c.bf16 %v498, %v495
          %v705 = vpack.c.bf16 %v583, %v580
          %v706 = vpack.c.bf16 %v668, %v665
          %vm707 = vcmask 64512
          %v709 = vsel %vm707, %v704, 0
          %v712 = vsel %vm707, %v705, 0
          %714 = vmatprep.subr.bf16.mxu0 0
          %715 = vmatpush1.bf16.xpose.msra.mxu0 %v712
          %716 = vmatprep.subr.bf16.mxu0 0
          %717 = vmatpush1.bf16.xpose.msra.mxu0 0
          %718 = vmatprep.subr.bf16.mxu0 0
          %719 = vmatpush1.bf16.xpose.msra.mxu0 0
          %720 = vmatprep.subr.bf16.mxu0 0
          %721 = vmatpush1.bf16.xpose.msra.mxu0 0
          %722 = vmatprep.subr.bf16.mxu0 0
          %723 = vmatpush1.bf16.xpose.msra.mxu0 0
          %724 = vmatprep.subr.bf16.mxu0 0
          %725 = vmatpush1.bf16.xpose.msra.mxu0 0
          %726 = vmatprep.subr.bf16.mxu0 0
          %727 = vmatpush1.bf16.xpose.msra.mxu0 0
          %728 = vmatprep.subr.bf16.mxu0 0
          %729 = vmatpush1.bf16.xpose.msra.mxu0 0
          %730 = vmatprep.subr.bf16.mxu0 0
          %731 = vmatpush1.bf16.xpose.msra.mxu0 0
          %732 = vmatprep.subr.bf16.mxu0 0
          %733 = vmatpush1.bf16.xpose.msra.mxu0 0
          %734 = vmatprep.subr.bf16.mxu0 0
          %735 = vmatpush1.bf16.xpose.msra.mxu0 0
          %736 = vmatprep.subr.bf16.mxu0 0
          %737 = vmatpush1.bf16.xpose.msra.mxu0 0
          %738 = vmatprep.subr.bf16.mxu0 0
          %739 = vmatpush1.bf16.xpose.msra.mxu0 0
          %740 = vmatprep.subr.bf16.mxu0 0
          %741 = vmatpush1.bf16.xpose.msra.mxu0 0
          %742 = vmatprep.subr.bf16.mxu0 0
          %743 = vmatpush1.bf16.xpose.msra.mxu0 0
          %744 = vmatprep.subr.bf16.mxu0 0
          %745 = vmatpush1.bf16.xpose.msra.mxu0 0
          %746 = vmatprep.mubr.bf16.mxu0 0
          %747 = vmatmul.mubr.bf16.gmra.mrb[0].mxu0 %v709
          %v748 = vpop.f32.mrb[0].mxu0
          %v749 = vadd.f32 0.0, %v748
          %v750 = vpop.f32.mrb[0].mxu0
          %v751 = vpop.f32.mrb[0].mxu0
          %v752 = vadd.f32 0.0, %v751
          %v753 = vpop.f32.mrb[0].mxu0
          %754 = vdwg.mxu0
          %v755 = vmul.f32 %v749, 0.35355338
          %v756 = vmul.f32 %v752, 0.35355338
          %v757 = vadd.f32 %v755, %v702
          %v758 = vadd.f32 %v756, %v703
          %vm759 = vcmask 130048
          %v760 = vsel %vm759, %v757, -inf
          %761 = vmax.xlane.f32.xlu0 %v760
          %v762 = vpop.xlane.xlu0 %761
          %v763 = vsel %vm759, %v758, -inf
          %764 = vmax.xlane.f32.xlu0 %v763
          %v765 = vpop.xlane.xlu0 %764
          %v766 = vsub.f32 %v757, %v762
          %v767 = vsub.f32 %v758, %v765
          %v768 = vmul.f32 %v766, 1.442695
          %v769 = vpow.pop %v768
          %v770 = vmul.f32 %v767, 1.442695
          %v771 = vpow.pop %v770
          %v772 = vsel %vm759, %v769, 0.0
          %773 = vadd.xlane.f32.xlu0 %v772
          %v774 = vpop.xlane.xlu0 %773
          %v775 = vsel %vm759, %v771, 0.0
          %776 = vadd.xlane.f32.xlu0 %v775
          %v777 = vpop.xlane.xlu0 %776
          %v778 = vrcp.pop %v774
          %v779 = vmul.f32 %v769, %v778
          %v780 = vrcp.pop %v777
          %v781 = vmul.f32 %v771, %v780
          %v782 = vpack.c.bf16 %v781, %v779
          %v784 = vsel %vm759, %v782, 0
          %786 = vmatprep.subr.bf16.mxu0 0
          %787 = vmatpush1.bf16.msra.mxu0 %v706
          %788 = vmatprep.subr.bf16.mxu0 0
          %789 = vmatpush1.bf16.msra.mxu0 0
          %790 = vmatprep.subr.bf16.mxu0 0
          %791 = vmatpush1.bf16.msra.mxu0 0
          %792 = vmatprep.subr.bf16.mxu0 0
          %793 = vmatpush1.bf16.msra.mxu0 0
          %794 = vmatprep.subr.bf16.mxu0 0
          %795 = vmatpush1.bf16.msra.mxu0 0
          %796 = vmatprep.subr.bf16.mxu0 0
          %797 = vmatpush1.bf16.msra.mxu0 0
          %798 = vmatprep.subr.bf16.mxu0 0
          %799 = vmatpush1.bf16.msra.mxu0 0
          %800 = vmatprep.subr.bf16.mxu0 0
          %801 = vmatpush1.bf16.msra.mxu0 0
          %802 = vmatprep.subr.bf16.mxu0 0
          %803 = vmatpush1.bf16.msra.mxu0 0
          %804 = vmatprep.subr.bf16.mxu0 0
          %805 = vmatpush1.bf16.msra.mxu0 0
          %806 = vmatprep.subr.bf16.mxu0 0
          %807 = vmatpush1.bf16.msra.mxu0 0
          %808 = vmatprep.subr.bf16.mxu0 0
          %809 = vmatpush1.bf16.msra.mxu0 0
          %810 = vmatprep.subr.bf16.mxu0 0
          %811 = vmatpush1.bf16.msra.mxu0 0
          %812 = vmatprep.subr.bf16.mxu0 0
          %813 = vmatpush1.bf16.msra.mxu0 0
          %814 = vmatprep.subr.bf16.mxu0 0
          %815 = vmatpush1.bf16.msra.mxu0 0
          %816 = vmatprep.subr.bf16.mxu0 0
          %817 = vmatpush1.bf16.msra.mxu0 0
          %818 = vmatprep.mubr.bf16.mxu0 0
          %819 = vmatmul.mubr.bf16.gmra.mrb[0].mxu0 %v784
          %v820 = vpop.f32.mrb[0].mxu0
          %v821 = vadd.f32 0.0, %v820
          %v822 = vpop.f32.mrb[0].mxu0
          %v823 = vpop.f32.mrb[0].mxu0
          %v824 = vadd.f32 0.0, %v823
          %v825 = vpop.f32.mrb[0].mxu0
          %826 = vdwg.mxu0
          %828 = vrot.lane.b32.xlu0 %v704, 120
          %v829 = vpop.permute.xlu0 %828
          %831 = vrot.lane.b32.xlu0 %v705, 120
          %v832 = vpop.permute.xlu0 %831
          %v834 = vsel %vm707, %v829, 0
          %v837 = vsel %vm707, %v832, 0
          %839 = vmatprep.subr.bf16.mxu0 0
          %840 = vmatpush1.bf16.xpose.msra.mxu0 %v837
          %841 = vmatprep.subr.bf16.mxu0 0
          %842 = vmatpush1.bf16.xpose.msra.mxu0 0
          %843 = vmatprep.subr.bf16.mxu0 0
          %844 = vmatpush1.bf16.xpose.msra.mxu0 0
          %845 = vmatprep.subr.bf16.mxu0 0
          %846 = vmatpush1.bf16.xpose.msra.mxu0 0
          %847 = vmatprep.subr.bf16.mxu0 0
          %848 = vmatpush1.bf16.xpose.msra.mxu0 0
          %849 = vmatprep.subr.bf16.mxu0 0
          %850 = vmatpush1.bf16.xpose.msra.mxu0 0
          %851 = vmatprep.subr.bf16.mxu0 0
          %852 = vmatpush1.bf16.xpose.msra.mxu0 0
          %853 = vmatprep.subr.bf16.mxu0 0
          %854 = vmatpush1.bf16.xpose.msra.mxu0 0
          %855 = vmatprep.subr.bf16.mxu0 0
          %856 = vmatpush1.bf16.xpose.msra.mxu0 0
          %857 = vmatprep.subr.bf16.mxu0 0
          %858 = vmatpush1.bf16.xpose.msra.mxu0 0
          %859 = vmatprep.subr.bf16.mxu0 0
          %860 = vmatpush1.bf16.xpose.msra.mxu0 0
          %861 = vmatprep.subr.bf16.mxu0 0
          %862 = vmatpush1.bf16.xpose.msra.mxu0 0
          %863 = vmatprep.subr.bf16.mxu0 0
          %864 = vmatpush1.bf16.xpose.msra.mxu0 0
          %865 = vmatprep.subr.bf16.mxu0 0
          %866 = vmatpush1.bf16.xpose.msra.mxu0 0
          %867 = vmatprep.subr.bf16.mxu0 0
          %868 = vmatpush1.bf16.xpose.msra.mxu0 0
          %869 = vmatprep.subr.bf16.mxu0 0
          %870 = vmatpush1.bf16.xpose.msra.mxu0 0
          %871 = vmatprep.mubr.bf16.mxu0 0
          %872 = vmatmul.mubr.bf16.gmra.mrb[0].mxu0 %v834
          %v873 = vpop.f32.mrb[0].mxu0
          %v874 = vadd.f32 0.0, %v873
          %v875 = vpop.f32.mrb[0].mxu0
          %v876 = vpop.f32.mrb[0].mxu0
          %v877 = vadd.f32 0.0, %v876
          %v878 = vpop.f32.mrb[0].mxu0
          %879 = vdwg.mxu0
          %v880 = vmul.f32 %v874, 0.35355338
          %v881 = vmul.f32 %v877, 0.35355338
          %v882 = vadd.f32 %v880, %v702
          %v883 = vadd.f32 %v881, %v703
          %v884 = vsel %vm759, %v882, -inf
          %885 = vmax.xlane.f32.xlu0 %v884
          %v886 = vpop.xlane.xlu0 %885
          %v887 = vsel %vm759, %v883, -inf
          %888 = vmax.xlane.f32.xlu0 %v887
          %v889 = vpop.xlane.xlu0 %888
          %v890 = vsub.f32 %v882, %v886
          %v891 = vsub.f32 %v883, %v889
          %v892 = vmul.f32 %v890, 1.442695
          %v893 = vpow.pop %v892
          %v894 = vmul.f32 %v891, 1.442695
          %v895 = vpow.pop %v894
          %v896 = vsel %vm759, %v893, 0.0
          %897 = vadd.xlane.f32.xlu0 %v896
          %v898 = vpop.xlane.xlu0 %897
          %v899 = vsel %vm759, %v895, 0.0
          %900 = vadd.xlane.f32.xlu0 %v899
          %v901 = vpop.xlane.xlu0 %900
          %v902 = vrcp.pop %v898
          %v903 = vmul.f32 %v893, %v902
          %v904 = vrcp.pop %v901
          %v905 = vmul.f32 %v895, %v904
          %v906 = vpack.c.bf16 %v905, %v903
          %908 = vrot.lane.b32.xlu0 %v706, 120
          %v909 = vpop.permute.xlu0 %908
          %v912 = vsel %vm759, %v906, 0
          %914 = vmatprep.subr.bf16.mxu0 0
          %915 = vmatpush1.bf16.msra.mxu0 %v909
          %916 = vmatprep.subr.bf16.mxu0 0
          %917 = vmatpush1.bf16.msra.mxu0 0
          %918 = vmatprep.subr.bf16.mxu0 0
          %919 = vmatpush1.bf16.msra.mxu0 0
          %920 = vmatprep.subr.bf16.mxu0 0
          %921 = vmatpush1.bf16.msra.mxu0 0
          %922 = vmatprep.subr.bf16.mxu0 0
          %923 = vmatpush1.bf16.msra.mxu0 0
          %924 = vmatprep.subr.bf16.mxu0 0
          %925 = vmatpush1.bf16.msra.mxu0 0
          %926 = vmatprep.subr.bf16.mxu0 0
          %927 = vmatpush1.bf16.msra.mxu0 0
          %928 = vmatprep.subr.bf16.mxu0 0
          %929 = vmatpush1.bf16.msra.mxu0 0
          %930 = vmatprep.subr.bf16.mxu0 0
          %931 = vmatpush1.bf16.msra.mxu0 0
          %932 = vmatprep.subr.bf16.mxu0 0
          %933 = vmatpush1.bf16.msra.mxu0 0
          %934 = vmatprep.subr.bf16.mxu0 0
          %935 = vmatpush1.bf16.msra.mxu0 0
          %936 = vmatprep.subr.bf16.mxu0 0
          %937 = vmatpush1.bf16.msra.mxu0 0
          %938 = vmatprep.subr.bf16.mxu0 0
          %939 = vmatpush1.bf16.msra.mxu0 0
          %940 = vmatprep.subr.bf16.mxu0 0
          %941 = vmatpush1.bf16.msra.mxu0 0
          %942 = vmatprep.subr.bf16.mxu0 0
          %943 = vmatpush1.bf16.msra.mxu0 0
          %944 = vmatprep.subr.bf16.mxu0 0
          %945 = vmatpush1.bf16.msra.mxu0 0
          %946 = vmatprep.mubr.bf16.mxu0 0
          %947 = vmatmul.mubr.bf16.gmra.mrb[0].mxu0 %v912
          %v948 = vpop.f32.mrb[0].mxu0
          %v949 = vadd.f32 0.0, %v948
          %v950 = vpop.f32.mrb[0].mxu0
          %v951 = vpop.f32.mrb[0].mxu0
          %v952 = vadd.f32 0.0, %v951
          %v953 = vpop.f32.mrb[0].mxu0
          %954 = vdwg.mxu0
          %955 = vrot.lane.b32.xlu0 %v704, 112
          %v956 = vpop.permute.xlu0 %955
          %957 = vrot.lane.b32.xlu0 %v705, 112
          %v958 = vpop.permute.xlu0 %957
          %v960 = vsel %vm707, %v956, 0
          %v963 = vsel %vm707, %v958, 0
          %965 = vmatprep.subr.bf16.mxu0 0
          %966 = vmatpush1.bf16.xpose.msra.mxu0 %v963
          %967 = vmatprep.subr.bf16.mxu0 0
          %968 = vmatpush1.bf16.xpose.msra.mxu0 0
          %969 = vmatprep.subr.bf16.mxu0 0
          %970 = vmatpush1.bf16.xpose.msra.mxu0 0
          %971 = vmatprep.subr.bf16.mxu0 0
          %972 = vmatpush1.bf16.xpose.msra.mxu0 0
          %973 = vmatprep.subr.bf16.mxu0 0
          %974 = vmatpush1.bf16.xpose.msra.mxu0 0
          %975 = vmatprep.subr.bf16.mxu0 0
          %976 = vmatpush1.bf16.xpose.msra.mxu0 0
          %977 = vmatprep.subr.bf16.mxu0 0
          %978 = vmatpush1.bf16.xpose.msra.mxu0 0
          %979 = vmatprep.subr.bf16.mxu0 0
          %980 = vmatpush1.bf16.xpose.msra.mxu0 0
          %981 = vmatprep.subr.bf16.mxu0 0
          %982 = vmatpush1.bf16.xpose.msra.mxu0 0
          %983 = vmatprep.subr.bf16.mxu0 0
          %984 = vmatpush1.bf16.xpose.msra.mxu0 0
          %985 = vmatprep.subr.bf16.mxu0 0
          %986 = vmatpush1.bf16.xpose.msra.mxu0 0
          %987 = vmatprep.subr.bf16.mxu0 0
          %988 = vmatpush1.bf16.xpose.msra.mxu0 0
          %989 = vmatprep.subr.bf16.mxu0 0
          %990 = vmatpush1.bf16.xpose.msra.mxu0 0
          %991 = vmatprep.subr.bf16.mxu0 0
          %992 = vmatpush1.bf16.xpose.msra.mxu0 0
          %993 = vmatprep.subr.bf16.mxu0 0
          %994 = vmatpush1.bf16.xpose.msra.mxu0 0
          %995 = vmatprep.subr.bf16.mxu0 0
          %996 = vmatpush1.bf16.xpose.msra.mxu0 0
          %997 = vmatprep.mubr.bf16.mxu0 0
          %998 = vmatmul.mubr.bf16.gmra.mrb[0].mxu0 %v960
          %v999 = vpop.f32.mrb[0].mxu0
          %v1000 = vadd.f32 0.0, %v999
          %v1001 = vpop.f32.mrb[0].mxu0
          %v1002 = vpop.f32.mrb[0].mxu0
          %v1003 = vadd.f32 0.0, %v1002
          %v1004 = vpop.f32.mrb[0].mxu0
          %1005 = vdwg.mxu0
          %v1006 = vmul.f32 %v1000, 0.35355338
          %v1007 = vmul.f32 %v1003, 0.35355338
          %v1008 = vadd.f32 %v1006, %v702
          %v1009 = vadd.f32 %v1007, %v703
          %v1010 = vsel %vm759, %v1008, -inf
          %1011 = vmax.xlane.f32.xlu0 %v1010
          %v1012 = vpop.xlane.xlu0 %1011
          %v1013 = vsel %vm759, %v1009, -inf
          %1014 = vmax.xlane.f32.xlu0 %v1013
          %v1015 = vpop.xlane.xlu0 %1014
          %v1016 = vsub.f32 %v1008, %v1012
          %v1017 = vsub.f32 %v1009, %v1015
          %v1018 = vmul.f32 %v1016, 1.442695
          %v1019 = vpow.pop %v1018
          %v1020 = vmul.f32 %v1017, 1.442695
          %v1021 = vpow.pop %v1020
          %v1022 = vsel %vm759, %v1019, 0.0
          %1023 = vadd.xlane.f32.xlu0 %v1022
          %v1024 = vpop.xlane.xlu0 %1023
          %v1025 = vsel %vm759, %v1021, 0.0
          %1026 = vadd.xlane.f32.xlu0 %v1025
          %v1027 = vpop.xlane.xlu0 %1026
          %v1028 = vrcp.pop %v1024
          %v1029 = vmul.f32 %v1019, %v1028
          %v1030 = vrcp.pop %v1027
          %v1031 = vmul.f32 %v1021, %v1030
          %v1032 = vpack.c.bf16 %v1031, %v1029
          %1033 = vrot.lane.b32.xlu0 %v706, 112
          %v1034 = vpop.permute.xlu0 %1033
          %v1037 = vsel %vm759, %v1032, 0
          %1039 = vmatprep.subr.bf16.mxu0 0
          %1040 = vmatpush1.bf16.msra.mxu0 %v1034
          %1041 = vmatprep.subr.bf16.mxu0 0
          %1042 = vmatpush1.bf16.msra.mxu0 0
          %1043 = vmatprep.subr.bf16.mxu0 0
          %1044 = vmatpush1.bf16.msra.mxu0 0
          %1045 = vmatprep.subr.bf16.mxu0 0
          %1046 = vmatpush1.bf16.msra.mxu0 0
          %1047 = vmatprep.subr.bf16.mxu0 0
          %1048 = vmatpush1.bf16.msra.mxu0 0
          %1049 = vmatprep.subr.bf16.mxu0 0
          %1050 = vmatpush1.bf16.msra.mxu0 0
          %1051 = vmatprep.subr.bf16.mxu0 0
          %1052 = vmatpush1.bf16.msra.mxu0 0
          %1053 = vmatprep.subr.bf16.mxu0 0
          %1054 = vmatpush1.bf16.msra.mxu0 0
          %1055 = vmatprep.subr.bf16.mxu0 0
          %1056 = vmatpush1.bf16.msra.mxu0 0
          %1057 = vmatprep.subr.bf16.mxu0 0
          %1058 = vmatpush1.bf16.msra.mxu0 0
          %1059 = vmatprep.subr.bf16.mxu0 0
          %1060 = vmatpush1.bf16.msra.mxu0 0
          %1061 = vmatprep.subr.bf16.mxu0 0
          %1062 = vmatpush1.bf16.msra.mxu0 0
          %1063 = vmatprep.subr.bf16.mxu0 0
          %1064 = vmatpush1.bf16.msra.mxu0 0
          %1065 = vmatprep.subr.bf16.mxu0 0
          %1066 = vmatpush1.bf16.msra.mxu0 0
          %1067 = vmatprep.subr.bf16.mxu0 0
          %1068 = vmatpush1.bf16.msra.mxu0 0
          %1069 = vmatprep.subr.bf16.mxu0 0
          %1070 = vmatpush1.bf16.msra.mxu0 0
          %1071 = vmatprep.mubr.bf16.mxu0 0
          %1072 = vmatmul.mubr.bf16.gmra.mrb[0].mxu0 %v1037
          %v1073 = vpop.f32.mrb[0].mxu0
          %v1074 = vadd.f32 0.0, %v1073
          %v1075 = vpop.f32.mrb[0].mxu0
          %v1076 = vpop.f32.mrb[0].mxu0
          %v1077 = vadd.f32 0.0, %v1076
          %v1078 = vpop.f32.mrb[0].mxu0
          %1079 = vdwg.mxu0
          %1080 = vrot.lane.b32.xlu0 %v704, 104
          %v1081 = vpop.permute.xlu0 %1080
          %1082 = vrot.lane.b32.xlu0 %v705, 104
          %v1083 = vpop.permute.xlu0 %1082
          %v1085 = vsel %vm707, %v1081, 0
          %v1088 = vsel %vm707, %v1083, 0
          %1090 = vmatprep.subr.bf16.mxu0 0
          %1091 = vmatpush1.bf16.xpose.msra.mxu0 %v1088
          %1092 = vmatprep.subr.bf16.mxu0 0
          %1093 = vmatpush1.bf16.xpose.msra.mxu0 0
          %1094 = vmatprep.subr.bf16.mxu0 0
          %1095 = vmatpush1.bf16.xpose.msra.mxu0 0
          %1096 = vmatprep.subr.bf16.mxu0 0
          %1097 = vmatpush1.bf16.xpose.msra.mxu0 0
          %1098 = vmatprep.subr.bf16.mxu0 0
          %1099 = vmatpush1.bf16.xpose.msra.mxu0 0
          %1100 = vmatprep.subr.bf16.mxu0 0
          %1101 = vmatpush1.bf16.xpose.msra.mxu0 0
          %1102 = vmatprep.subr.bf16.mxu0 0
          %1103 = vmatpush1.bf16.xpose.msra.mxu0 0
          %1104 = vmatprep.subr.bf16.mxu0 0
          %1105 = vmatpush1.bf16.xpose.msra.mxu0 0
          %1106 = vmatprep.subr.bf16.mxu0 0
          %1107 = vmatpush1.bf16.xpose.msra.mxu0 0
          %1108 = vmatprep.subr.bf16.mxu0 0
          %1109 = vmatpush1.bf16.xpose.msra.mxu0 0
          %1110 = vmatprep.subr.bf16.mxu0 0
          %1111 = vmatpush1.bf16.xpose.msra.mxu0 0
          %1112 = vmatprep.subr.bf16.mxu0 0
          %1113 = vmatpush1.bf16.xpose.msra.mxu0 0
          %1114 = vmatprep.subr.bf16.mxu0 0
          %1115 = vmatpush1.bf16.xpose.msra.mxu0 0
          %1116 = vmatprep.subr.bf16.mxu0 0
          %1117 = vmatpush1.bf16.xpose.msra.mxu0 0
          %1118 = vmatprep.subr.bf16.mxu0 0
          %1119 = vmatpush1.bf16.xpose.msra.mxu0 0
          %1120 = vmatprep.subr.bf16.mxu0 0
          %1121 = vmatpush1.bf16.xpose.msra.mxu0 0
          %1122 = vmatprep.mubr.bf16.mxu0 0
          %1123 = vmatmul.mubr.bf16.gmra.mrb[0].mxu0 %v1085
          %v1124 = vpop.f32.mrb[0].mxu0
          %v1125 = vadd.f32 0.0, %v1124
          %v1126 = vpop.f32.mrb[0].mxu0
          %v1127 = vpop.f32.mrb[0].mxu0
          %v1128 = vadd.f32 0.0, %v1127
          %v1129 = vpop.f32.mrb[0].mxu0
          %1130 = vdwg.mxu0
          %v1131 = vmul.f32 %v1125, 0.35355338
          %v1132 = vmul.f32 %v1128, 0.35355338
          %v1133 = vadd.f32 %v1131, %v702
          %v1134 = vadd.f32 %v1132, %v703
          %v1135 = vsel %vm759, %v1133, -inf
          %1136 = vmax.xlane.f32.xlu0 %v1135
          %v1137 = vpop.xlane.xlu0 %1136
          %v1138 = vsel %vm759, %v1134, -inf
          %1139 = vmax.xlane.f32.xlu0 %v1138
          %v1140 = vpop.xlane.xlu0 %1139
          %v1141 = vsub.f32 %v1133, %v1137
          %v1142 = vsub.f32 %v1134, %v1140
          %v1143 = vmul.f32 %v1141, 1.442695
          %v1144 = vpow.pop %v1143
          %v1145 = vmul.f32 %v1142, 1.442695
          %v1146 = vpow.pop %v1145
          %v1147 = vsel %vm759, %v1144, 0.0
          %1148 = vadd.xlane.f32.xlu0 %v1147
          %v1149 = vpop.xlane.xlu0 %1148
          %v1150 = vsel %vm759, %v1146, 0.0
          %1151 = vadd.xlane.f32.xlu0 %v1150
          %v1152 = vpop.xlane.xlu0 %1151
          %v1153 = vrcp.pop %v1149
          %v1154 = vmul.f32 %v1144, %v1153
          %v1155 = vrcp.pop %v1152
          %v1156 = vmul.f32 %v1146, %v1155
          %v1157 = vpack.c.bf16 %v1156, %v1154
          %1158 = vrot.lane.b32.xlu0 %v706, 104
          %v1159 = vpop.permute.xlu0 %1158
          %v1162 = vsel %vm759, %v1157, 0
          %1164 = vmatprep.subr.bf16.mxu0 0
          %1165 = vmatpush1.bf16.msra.mxu0 %v1159
          %1166 = vmatprep.subr.bf16.mxu0 0
          %1167 = vmatpush1.bf16.msra.mxu0 0
          %1168 = vmatprep.subr.bf16.mxu0 0
          %1169 = vmatpush1.bf16.msra.mxu0 0
          %1170 = vmatprep.subr.bf16.mxu0 0
          %1171 = vmatpush1.bf16.msra.mxu0 0
          %1172 = vmatprep.subr.bf16.mxu0 0
          %1173 = vmatpush1.bf16.msra.mxu0 0
          %1174 = vmatprep.subr.bf16.mxu0 0
          %1175 = vmatpush1.bf16.msra.mxu0 0
          %1176 = vmatprep.subr.bf16.mxu0 0
          %1177 = vmatpush1.bf16.msra.mxu0 0
          %1178 = vmatprep.subr.bf16.mxu0 0
          %1179 = vmatpush1.bf16.msra.mxu0 0
          %1180 = vmatprep.subr.bf16.mxu0 0
          %1181 = vmatpush1.bf16.msra.mxu0 0
          %1182 = vmatprep.subr.bf16.mxu0 0
          %1183 = vmatpush1.bf16.msra.mxu0 0
          %1184 = vmatprep.subr.bf16.mxu0 0
          %1185 = vmatpush1.bf16.msra.mxu0 0
          %1186 = vmatprep.subr.bf16.mxu0 0
          %1187 = vmatpush1.bf16.msra.mxu0 0
          %1188 = vmatprep.subr.bf16.mxu0 0
          %1189 = vmatpush1.bf16.msra.mxu0 0
          %1190 = vmatprep.subr.bf16.mxu0 0
          %1191 = vmatpush1.bf16.msra.mxu0 0
          %1192 = vmatprep.subr.bf16.mxu0 0
          %1193 = vmatpush1.bf16.msra.mxu0 0
          %1194 = vmatprep.subr.bf16.mxu0 0
          %1195 = vmatpush1.bf16.msra.mxu0 0
          %1196 = vmatprep.mubr.bf16.mxu0 0
          %1197 = vmatmul.mubr.bf16.gmra.mrb[0].mxu0 %v1162
          %v1198 = vpop.f32.mrb[0].mxu0
          %v1199 = vadd.f32 0.0, %v1198
          %v1200 = vpop.f32.mrb[0].mxu0
          %v1201 = vpop.f32.mrb[0].mxu0
          %v1202 = vadd.f32 0.0, %v1201
          %v1203 = vpop.f32.mrb[0].mxu0
          %1204 = vdwg.mxu0
          %1205 = vrot.lane.b32.xlu0 %v704, 96
          %v1206 = vpop.permute.xlu0 %1205
          %1207 = vrot.lane.b32.xlu0 %v705, 96
          %v1208 = vpop.permute.xlu0 %1207
          %v1210 = vsel %vm707, %v1206, 0
          %v1213 = vsel %vm707, %v1208, 0
          %1215 = vmatprep.subr.bf16.mxu0 0
          %1216 = vmatpush1.bf16.xpose.msra.mxu0 %v1213
          %1217 = vmatprep.subr.bf16.mxu0 0
          %1218 = vmatpush1.bf16.xpose.msra.mxu0 0
          %1219 = vmatprep.subr.bf16.mxu0 0
          %1220 = vmatpush1.bf16.xpose.msra.mxu0 0
          %1221 = vmatprep.subr.bf16.mxu0 0
          %1222 = vmatpush1.bf16.xpose.msra.mxu0 0
          %1223 = vmatprep.subr.bf16.mxu0 0
          %1224 = vmatpush1.bf16.xpose.msra.mxu0 0
          %1225 = vmatprep.subr.bf16.mxu0 0
          %1226 = vmatpush1.bf16.xpose.msra.mxu0 0
          %1227 = vmatprep.subr.bf16.mxu0 0
          %1228 = vmatpush1.bf16.xpose.msra.mxu0 0
          %1229 = vmatprep.subr.bf16.mxu0 0
          %1230 = vmatpush1.bf16.xpose.msra.mxu0 0
          %1231 = vmatprep.subr.bf16.mxu0 0
          %1232 = vmatpush1.bf16.xpose.msra.mxu0 0
          %1233 = vmatprep.subr.bf16.mxu0 0
          %1234 = vmatpush1.bf16.xpose.msra.mxu0 0
          %1235 = vmatprep.subr.bf16.mxu0 0
          %1236 = vmatpush1.bf16.xpose.msra.mxu0 0
          %1237 = vmatprep.subr.bf16.mxu0 0
          %1238 = vmatpush1.bf16.xpose.msra.mxu0 0
          %1239 = vmatprep.subr.bf16.mxu0 0
          %1240 = vmatpush1.bf16.xpose.msra.mxu0 0
          %1241 = vmatprep.subr.bf16.mxu0 0
          %1242 = vmatpush1.bf16.xpose.msra.mxu0 0
          %1243 = vmatprep.subr.bf16.mxu0 0
          %1244 = vmatpush1.bf16.xpose.msra.mxu0 0
          %1245 = vmatprep.subr.bf16.mxu0 0
          %1246 = vmatpush1.bf16.xpose.msra.mxu0 0
          %1247 = vmatprep.mubr.bf16.mxu0 0
          %1248 = vmatmul.mubr.bf16.gmra.mrb[0].mxu0 %v1210
          %v1249 = vpop.f32.mrb[0].mxu0
          %v1250 = vadd.f32 0.0, %v1249
          %v1251 = vpop.f32.mrb[0].mxu0
          %v1252 = vpop.f32.mrb[0].mxu0
          %v1253 = vadd.f32 0.0, %v1252
          %v1254 = vpop.f32.mrb[0].mxu0
          %1255 = vdwg.mxu0
          %v1256 = vmul.f32 %v1250, 0.35355338
          %v1257 = vmul.f32 %v1253, 0.35355338
          %v1258 = vadd.f32 %v1256, %v702
          %v1259 = vadd.f32 %v1257, %v703
          %v1260 = vsel %vm759, %v1258, -inf
          %1261 = vmax.xlane.f32.xlu0 %v1260
          %v1262 = vpop.xlane.xlu0 %1261
          %v1263 = vsel %vm759, %v1259, -inf
          %1264 = vmax.xlane.f32.xlu0 %v1263
          %v1265 = vpop.xlane.xlu0 %1264
          %v1266 = vsub.f32 %v1258, %v1262
          %v1267 = vsub.f32 %v1259, %v1265
          %v1268 = vmul.f32 %v1266, 1.442695
          %v1269 = vpow.pop %v1268
          %v1270 = vmul.f32 %v1267, 1.442695
          %v1271 = vpow.pop %v1270
          %v1272 = vsel %vm759, %v1269, 0.0
          %1273 = vadd.xlane.f32.xlu0 %v1272
          %v1274 = vpop.xlane.xlu0 %1273
          %v1275 = vsel %vm759, %v1271, 0.0
          %1276 = vadd.xlane.f32.xlu0 %v1275
          %v1277 = vpop.xlane.xlu0 %1276
          %v1278 = vrcp.pop %v1274
          %v1279 = vmul.f32 %v1269, %v1278
          %v1280 = vrcp.pop %v1277
          %v1281 = vmul.f32 %v1271, %v1280
          %v1282 = vpack.c.bf16 %v1281, %v1279
          %1283 = vrot.lane.b32.xlu0 %v706, 96
          %v1284 = vpop.permute.xlu0 %1283
          %v1287 = vsel %vm759, %v1282, 0
          %1289 = vmatprep.subr.bf16.mxu0 0
          %1290 = vmatpush1.bf16.msra.mxu0 %v1284
          %1291 = vmatprep.subr.bf16.mxu0 0
          %1292 = vmatpush1.bf16.msra.mxu0 0
          %1293 = vmatprep.subr.bf16.mxu0 0
          %1294 = vmatpush1.bf16.msra.mxu0 0
          %1295 = vmatprep.subr.bf16.mxu0 0
          %1296 = vmatpush1.bf16.msra.mxu0 0
          %1297 = vmatprep.subr.bf16.mxu0 0
          %1298 = vmatpush1.bf16.msra.mxu0 0
          %1299 = vmatprep.subr.bf16.mxu0 0
          %1300 = vmatpush1.bf16.msra.mxu0 0
          %1301 = vmatprep.subr.bf16.mxu0 0
          %1302 = vmatpush1.bf16.msra.mxu0 0
          %1303 = vmatprep.subr.bf16.mxu0 0
          %1304 = vmatpush1.bf16.msra.mxu0 0
          %1305 = vmatprep.subr.bf16.mxu0 0
          %1306 = vmatpush1.bf16.msra.mxu0 0
          %1307 = vmatprep.subr.bf16.mxu0 0
          %1308 = vmatpush1.bf16.msra.mxu0 0
          %1309 = vmatprep.subr.bf16.mxu0 0
          %1310 = vmatpush1.bf16.msra.mxu0 0
          %1311 = vmatprep.subr.bf16.mxu0 0
          %1312 = vmatpush1.bf16.msra.mxu0 0
          %1313 = vmatprep.subr.bf16.mxu0 0
          %1314 = vmatpush1.bf16.msra.mxu0 0
          %1315 = vmatprep.subr.bf16.mxu0 0
          %1316 = vmatpush1.bf16.msra.mxu0 0
          %1317 = vmatprep.subr.bf16.mxu0 0
          %1318 = vmatpush1.bf16.msra.mxu0 0
          %1319 = vmatprep.subr.bf16.mxu0 0
          %1320 = vmatpush1.bf16.msra.mxu0 0
          %1321 = vmatprep.mubr.bf16.mxu0 0
          %1322 = vmatmul.mubr.bf16.gmra.mrb[0].mxu0 %v1287
          %v1323 = vpop.f32.mrb[0].mxu0
          %v1324 = vadd.f32 0.0, %v1323
          %v1325 = vpop.f32.mrb[0].mxu0
          %v1326 = vpop.f32.mrb[0].mxu0
          %v1327 = vadd.f32 0.0, %v1326
          %v1328 = vpop.f32.mrb[0].mxu0
          %1329 = vdwg.mxu0
          %1330 = vrot.lane.b32.xlu0 %v704, 88
          %v1331 = vpop.permute.xlu0 %1330
          %1332 = vrot.lane.b32.xlu0 %v705, 88
          %v1333 = vpop.permute.xlu0 %1332
          %v1335 = vsel %vm707, %v1331, 0
          %v1338 = vsel %vm707, %v1333, 0
          %1340 = vmatprep.subr.bf16.mxu0 0
          %1341 = vmatpush1.bf16.xpose.msra.mxu0 %v1338
          %1342 = vmatprep.subr.bf16.mxu0 0
          %1343 = vmatpush1.bf16.xpose.msra.mxu0 0
          %1344 = vmatprep.subr.bf16.mxu0 0
          %1345 = vmatpush1.bf16.xpose.msra.mxu0 0
          %1346 = vmatprep.subr.bf16.mxu0 0
          %1347 = vmatpush1.bf16.xpose.msra.mxu0 0
          %1348 = vmatprep.subr.bf16.mxu0 0
          %1349 = vmatpush1.bf16.xpose.msra.mxu0 0
          %1350 = vmatprep.subr.bf16.mxu0 0
          %1351 = vmatpush1.bf16.xpose.msra.mxu0 0
          %1352 = vmatprep.subr.bf16.mxu0 0
          %1353 = vmatpush1.bf16.xpose.msra.mxu0 0
          %1354 = vmatprep.subr.bf16.mxu0 0
          %1355 = vmatpush1.bf16.xpose.msra.mxu0 0
          %1356 = vmatprep.subr.bf16.mxu0 0
          %1357 = vmatpush1.bf16.xpose.msra.mxu0 0
          %1358 = vmatprep.subr.bf16.mxu0 0
          %1359 = vmatpush1.bf16.xpose.msra.mxu0 0
          %1360 = vmatprep.subr.bf16.mxu0 0
          %1361 = vmatpush1.bf16.xpose.msra.mxu0 0
          %1362 = vmatprep.subr.bf16.mxu0 0
          %1363 = vmatpush1.bf16.xpose.msra.mxu0 0
          %1364 = vmatprep.subr.bf16.mxu0 0
          %1365 = vmatpush1.bf16.xpose.msra.mxu0 0
          %1366 = vmatprep.subr.bf16.mxu0 0
          %1367 = vmatpush1.bf16.xpose.msra.mxu0 0
          %1368 = vmatprep.subr.bf16.mxu0 0
          %1369 = vmatpush1.bf16.xpose.msra.mxu0 0
          %1370 = vmatprep.subr.bf16.mxu0 0
          %1371 = vmatpush1.bf16.xpose.msra.mxu0 0
          %1372 = vmatprep.mubr.bf16.mxu0 0
          %1373 = vmatmul.mubr.bf16.gmra.mrb[0].mxu0 %v1335
          %v1374 = vpop.f32.mrb[0].mxu0
          %v1375 = vadd.f32 0.0, %v1374
          %v1376 = vpop.f32.mrb[0].mxu0
          %v1377 = vpop.f32.mrb[0].mxu0
          %v1378 = vadd.f32 0.0, %v1377
          %v1379 = vpop.f32.mrb[0].mxu0
          %1380 = vdwg.mxu0
          %v1381 = vmul.f32 %v1375, 0.35355338
          %v1382 = vmul.f32 %v1378, 0.35355338
          %v1383 = vadd.f32 %v1381, %v702
          %v1384 = vadd.f32 %v1382, %v703
          %v1385 = vsel %vm759, %v1383, -inf
          %1386 = vmax.xlane.f32.xlu0 %v1385
          %v1387 = vpop.xlane.xlu0 %1386
          %v1388 = vsel %vm759, %v1384, -inf
          %1389 = vmax.xlane.f32.xlu0 %v1388
          %v1390 = vpop.xlane.xlu0 %1389
          %v1391 = vsub.f32 %v1383, %v1387
          %v1392 = vsub.f32 %v1384, %v1390
          %v1393 = vmul.f32 %v1391, 1.442695
          %v1394 = vpow.pop %v1393
          %v1395 = vmul.f32 %v1392, 1.442695
          %v1396 = vpow.pop %v1395
          %v1397 = vsel %vm759, %v1394, 0.0
          %1398 = vadd.xlane.f32.xlu0 %v1397
          %v1399 = vpop.xlane.xlu0 %1398
          %v1400 = vsel %vm759, %v1396, 0.0
          %1401 = vadd.xlane.f32.xlu0 %v1400
          %v1402 = vpop.xlane.xlu0 %1401
          %v1403 = vrcp.pop %v1399
          %v1404 = vmul.f32 %v1394, %v1403
          %v1405 = vrcp.pop %v1402
          %v1406 = vmul.f32 %v1396, %v1405
          %v1407 = vpack.c.bf16 %v1406, %v1404
          %1408 = vrot.lane.b32.xlu0 %v706, 88
          %v1409 = vpop.permute.xlu0 %1408
          %v1412 = vsel %vm759, %v1407, 0
          %1414 = vmatprep.subr.bf16.mxu0 0
          %1415 = vmatpush1.bf16.msra.mxu0 %v1409
          %1416 = vmatprep.subr.bf16.mxu0 0
          %1417 = vmatpush1.bf16.msra.mxu0 0
          %1418 = vmatprep.subr.bf16.mxu0 0
          %1419 = vmatpush1.bf16.msra.mxu0 0
          %1420 = vmatprep.subr.bf16.mxu0 0
          %1421 = vmatpush1.bf16.msra.mxu0 0
          %1422 = vmatprep.subr.bf16.mxu0 0
          %1423 = vmatpush1.bf16.msra.mxu0 0
          %1424 = vmatprep.subr.bf16.mxu0 0
          %1425 = vmatpush1.bf16.msra.mxu0 0
          %1426 = vmatprep.subr.bf16.mxu0 0
          %1427 = vmatpush1.bf16.msra.mxu0 0
          %1428 = vmatprep.subr.bf16.mxu0 0
          %1429 = vmatpush1.bf16.msra.mxu0 0
          %1430 = vmatprep.subr.bf16.mxu0 0
          %1431 = vmatpush1.bf16.msra.mxu0 0
          %1432 = vmatprep.subr.bf16.mxu0 0
          %1433 = vmatpush1.bf16.msra.mxu0 0
          %1434 = vmatprep.subr.bf16.mxu0 0
          %1435 = vmatpush1.bf16.msra.mxu0 0
          %1436 = vmatprep.subr.bf16.mxu0 0
          %1437 = vmatpush1.bf16.msra.mxu0 0
          %1438 = vmatprep.subr.bf16.mxu0 0
          %1439 = vmatpush1.bf16.msra.mxu0 0
          %1440 = vmatprep.subr.bf16.mxu0 0
          %1441 = vmatpush1.bf16.msra.mxu0 0
          %1442 = vmatprep.subr.bf16.mxu0 0
          %1443 = vmatpush1.bf16.msra.mxu0 0
          %1444 = vmatprep.subr.bf16.mxu0 0
          %1445 = vmatpush1.bf16.msra.mxu0 0
          %1446 = vmatprep.mubr.bf16.mxu0 0
          %1447 = vmatmul.mubr.bf16.gmra.mrb[0].mxu0 %v1412
          %v1448 = vpop.f32.mrb[0].mxu0
          %v1449 = vadd.f32 0.0, %v1448
          %v1450 = vpop.f32.mrb[0].mxu0
          %v1451 = vpop.f32.mrb[0].mxu0
          %v1452 = vadd.f32 0.0, %v1451
          %v1453 = vpop.f32.mrb[0].mxu0
          %1454 = vdwg.mxu0
          %1455 = vrot.lane.b32.xlu0 %v704, 80
          %v1456 = vpop.permute.xlu0 %1455
          %1457 = vrot.lane.b32.xlu0 %v705, 80
          %v1458 = vpop.permute.xlu0 %1457
          %v1460 = vsel %vm707, %v1456, 0
          %v1463 = vsel %vm707, %v1458, 0
          %1465 = vmatprep.subr.bf16.mxu0 0
          %1466 = vmatpush1.bf16.xpose.msra.mxu0 %v1463
          %1467 = vmatprep.subr.bf16.mxu0 0
          %1468 = vmatpush1.bf16.xpose.msra.mxu0 0
          %1469 = vmatprep.subr.bf16.mxu0 0
          %1470 = vmatpush1.bf16.xpose.msra.mxu0 0
          %1471 = vmatprep.subr.bf16.mxu0 0
          %1472 = vmatpush1.bf16.xpose.msra.mxu0 0
          %1473 = vmatprep.subr.bf16.mxu0 0
          %1474 = vmatpush1.bf16.xpose.msra.mxu0 0
          %1475 = vmatprep.subr.bf16.mxu0 0
          %1476 = vmatpush1.bf16.xpose.msra.mxu0 0
          %1477 = vmatprep.subr.bf16.mxu0 0
          %1478 = vmatpush1.bf16.xpose.msra.mxu0 0
          %1479 = vmatprep.subr.bf16.mxu0 0
          %1480 = vmatpush1.bf16.xpose.msra.mxu0 0
          %1481 = vmatprep.subr.bf16.mxu0 0
          %1482 = vmatpush1.bf16.xpose.msra.mxu0 0
          %1483 = vmatprep.subr.bf16.mxu0 0
          %1484 = vmatpush1.bf16.xpose.msra.mxu0 0
          %1485 = vmatprep.subr.bf16.mxu0 0
          %1486 = vmatpush1.bf16.xpose.msra.mxu0 0
          %1487 = vmatprep.subr.bf16.mxu0 0
          %1488 = vmatpush1.bf16.xpose.msra.mxu0 0
          %1489 = vmatprep.subr.bf16.mxu0 0
          %1490 = vmatpush1.bf16.xpose.msra.mxu0 0
          %1491 = vmatprep.subr.bf16.mxu0 0
          %1492 = vmatpush1.bf16.xpose.msra.mxu0 0
          %1493 = vmatprep.subr.bf16.mxu0 0
          %1494 = vmatpush1.bf16.xpose.msra.mxu0 0
          %1495 = vmatprep.subr.bf16.mxu0 0
          %1496 = vmatpush1.bf16.xpose.msra.mxu0 0
          %1497 = vmatprep.mubr.bf16.mxu0 0
          %1498 = vmatmul.mubr.bf16.gmra.mrb[0].mxu0 %v1460
          %v1499 = vpop.f32.mrb[0].mxu0
          %v1500 = vadd.f32 0.0, %v1499
          %v1501 = vpop.f32.mrb[0].mxu0
          %v1502 = vpop.f32.mrb[0].mxu0
          %v1503 = vadd.f32 0.0, %v1502
          %v1504 = vpop.f32.mrb[0].mxu0
          %1505 = vdwg.mxu0
          %v1506 = vmul.f32 %v1500, 0.35355338
          %v1507 = vmul.f32 %v1503, 0.35355338
          %v1508 = vadd.f32 %v1506, %v702
          %v1509 = vadd.f32 %v1507, %v703
          %v1510 = vsel %vm759, %v1508, -inf
          %1511 = vmax.xlane.f32.xlu0 %v1510
          %v1512 = vpop.xlane.xlu0 %1511
          %v1513 = vsel %vm759, %v1509, -inf
          %1514 = vmax.xlane.f32.xlu0 %v1513
          %v1515 = vpop.xlane.xlu0 %1514
          %v1516 = vsub.f32 %v1508, %v1512
          %v1517 = vsub.f32 %v1509, %v1515
          %v1518 = vmul.f32 %v1516, 1.442695
          %v1519 = vpow.pop %v1518
          %v1520 = vmul.f32 %v1517, 1.442695
          %v1521 = vpow.pop %v1520
          %v1522 = vsel %vm759, %v1519, 0.0
          %1523 = vadd.xlane.f32.xlu0 %v1522
          %v1524 = vpop.xlane.xlu0 %1523
          %v1525 = vsel %vm759, %v1521, 0.0
          %1526 = vadd.xlane.f32.xlu0 %v1525
          %v1527 = vpop.xlane.xlu0 %1526
          %v1528 = vrcp.pop %v1524
          %v1529 = vmul.f32 %v1519, %v1528
          %v1530 = vrcp.pop %v1527
          %v1531 = vmul.f32 %v1521, %v1530
          %v1532 = vpack.c.bf16 %v1531, %v1529
          %1533 = vrot.lane.b32.xlu0 %v706, 80
          %v1534 = vpop.permute.xlu0 %1533
          %v1537 = vsel %vm759, %v1532, 0
          %1539 = vmatprep.subr.bf16.mxu0 0
          %1540 = vmatpush1.bf16.msra.mxu0 %v1534
          %1541 = vmatprep.subr.bf16.mxu0 0
          %1542 = vmatpush1.bf16.msra.mxu0 0
          %1543 = vmatprep.subr.bf16.mxu0 0
          %1544 = vmatpush1.bf16.msra.mxu0 0
          %1545 = vmatprep.subr.bf16.mxu0 0
          %1546 = vmatpush1.bf16.msra.mxu0 0
          %1547 = vmatprep.subr.bf16.mxu0 0
          %1548 = vmatpush1.bf16.msra.mxu0 0
          %1549 = vmatprep.subr.bf16.mxu0 0
          %1550 = vmatpush1.bf16.msra.mxu0 0
          %1551 = vmatprep.subr.bf16.mxu0 0
          %1552 = vmatpush1.bf16.msra.mxu0 0
          %1553 = vmatprep.subr.bf16.mxu0 0
          %1554 = vmatpush1.bf16.msra.mxu0 0
          %1555 = vmatprep.subr.bf16.mxu0 0
          %1556 = vmatpush1.bf16.msra.mxu0 0
          %1557 = vmatprep.subr.bf16.mxu0 0
          %1558 = vmatpush1.bf16.msra.mxu0 0
          %1559 = vmatprep.subr.bf16.mxu0 0
          %1560 = vmatpush1.bf16.msra.mxu0 0
          %1561 = vmatprep.subr.bf16.mxu0 0
          %1562 = vmatpush1.bf16.msra.mxu0 0
          %1563 = vmatprep.subr.bf16.mxu0 0
          %1564 = vmatpush1.bf16.msra.mxu0 0
          %1565 = vmatprep.subr.bf16.mxu0 0
          %1566 = vmatpush1.bf16.msra.mxu0 0
          %1567 = vmatprep.subr.bf16.mxu0 0
          %1568 = vmatpush1.bf16.msra.mxu0 0
          %1569 = vmatprep.subr.bf16.mxu0 0
          %1570 = vmatpush1.bf16.msra.mxu0 0
          %1571 = vmatprep.mubr.bf16.mxu0 0
          %1572 = vmatmul.mubr.bf16.gmra.mrb[0].mxu0 %v1537
          %v1573 = vpop.f32.mrb[0].mxu0
          %v1574 = vadd.f32 0.0, %v1573
          %v1575 = vpop.f32.mrb[0].mxu0
          %v1576 = vpop.f32.mrb[0].mxu0
          %v1577 = vadd.f32 0.0, %v1576
          %v1578 = vpop.f32.mrb[0].mxu0
          %1579 = vdwg.mxu0
          %1580 = vrot.lane.b32.xlu0 %v704, 72
          %v1581 = vpop.permute.xlu0 %1580
          %1582 = vrot.lane.b32.xlu0 %v705, 72
          %v1583 = vpop.permute.xlu0 %1582
          %v1585 = vsel %vm707, %v1581, 0
          %v1588 = vsel %vm707, %v1583, 0
          %1590 = vmatprep.subr.bf16.mxu0 0
          %1591 = vmatpush1.bf16.xpose.msra.mxu0 %v1588
          %1592 = vmatprep.subr.bf16.mxu0 0
          %1593 = vmatpush1.bf16.xpose.msra.mxu0 0
          %1594 = vmatprep.subr.bf16.mxu0 0
          %1595 = vmatpush1.bf16.xpose.msra.mxu0 0
          %1596 = vmatprep.subr.bf16.mxu0 0
          %1597 = vmatpush1.bf16.xpose.msra.mxu0 0
          %1598 = vmatprep.subr.bf16.mxu0 0
          %1599 = vmatpush1.bf16.xpose.msra.mxu0 0
          %1600 = vmatprep.subr.bf16.mxu0 0
          %1601 = vmatpush1.bf16.xpose.msra.mxu0 0
          %1602 = vmatprep.subr.bf16.mxu0 0
          %1603 = vmatpush1.bf16.xpose.msra.mxu0 0
          %1604 = vmatprep.subr.bf16.mxu0 0
          %1605 = vmatpush1.bf16.xpose.msra.mxu0 0
          %1606 = vmatprep.subr.bf16.mxu0 0
          %1607 = vmatpush1.bf16.xpose.msra.mxu0 0
          %1608 = vmatprep.subr.bf16.mxu0 0
          %1609 = vmatpush1.bf16.xpose.msra.mxu0 0
          %1610 = vmatprep.subr.bf16.mxu0 0
          %1611 = vmatpush1.bf16.xpose.msra.mxu0 0
          %1612 = vmatprep.subr.bf16.mxu0 0
          %1613 = vmatpush1.bf16.xpose.msra.mxu0 0
          %1614 = vmatprep.subr.bf16.mxu0 0
          %1615 = vmatpush1.bf16.xpose.msra.mxu0 0
          %1616 = vmatprep.subr.bf16.mxu0 0
          %1617 = vmatpush1.bf16.xpose.msra.mxu0 0
          %1618 = vmatprep.subr.bf16.mxu0 0
          %1619 = vmatpush1.bf16.xpose.msra.mxu0 0
          %1620 = vmatprep.subr.bf16.mxu0 0
          %1621 = vmatpush1.bf16.xpose.msra.mxu0 0
          %1622 = vmatprep.mubr.bf16.mxu0 0
          %1623 = vmatmul.mubr.bf16.gmra.mrb[0].mxu0 %v1585
          %v1624 = vpop.f32.mrb[0].mxu0
          %v1625 = vadd.f32 0.0, %v1624
          %v1626 = vpop.f32.mrb[0].mxu0
          %v1627 = vpop.f32.mrb[0].mxu0
          %v1628 = vadd.f32 0.0, %v1627
          %v1629 = vpop.f32.mrb[0].mxu0
          %1630 = vdwg.mxu0
          %v1631 = vmul.f32 %v1625, 0.35355338
          %v1632 = vmul.f32 %v1628, 0.35355338
          %v1633 = vadd.f32 %v1631, %v702
          %v1634 = vadd.f32 %v1632, %v703
          %v1635 = vsel %vm759, %v1633, -inf
          %1636 = vmax.xlane.f32.xlu0 %v1635
          %v1637 = vpop.xlane.xlu0 %1636
          %v1638 = vsel %vm759, %v1634, -inf
          %1639 = vmax.xlane.f32.xlu0 %v1638
          %v1640 = vpop.xlane.xlu0 %1639
          %v1641 = vsub.f32 %v1633, %v1637
          %v1642 = vsub.f32 %v1634, %v1640
          %v1643 = vmul.f32 %v1641, 1.442695
          %v1644 = vpow.pop %v1643
          %v1645 = vmul.f32 %v1642, 1.442695
          %v1646 = vpow.pop %v1645
          %v1647 = vsel %vm759, %v1644, 0.0
          %1648 = vadd.xlane.f32.xlu0 %v1647
          %v1649 = vpop.xlane.xlu0 %1648
          %v1650 = vsel %vm759, %v1646, 0.0
          %1651 = vadd.xlane.f32.xlu0 %v1650
          %v1652 = vpop.xlane.xlu0 %1651
          %v1653 = vrcp.pop %v1649
          %v1654 = vmul.f32 %v1644, %v1653
          %v1655 = vrcp.pop %v1652
          %v1656 = vmul.f32 %v1646, %v1655
          %v1657 = vpack.c.bf16 %v1656, %v1654
          %1658 = vrot.lane.b32.xlu0 %v706, 72
          %v1659 = vpop.permute.xlu0 %1658
          %v1662 = vsel %vm759, %v1657, 0
          %1664 = vmatprep.subr.bf16.mxu0 0
          %1665 = vmatpush1.bf16.msra.mxu0 %v1659
          %1666 = vmatprep.subr.bf16.mxu0 0
          %1667 = vmatpush1.bf16.msra.mxu0 0
          %1668 = vmatprep.subr.bf16.mxu0 0
          %1669 = vmatpush1.bf16.msra.mxu0 0
          %1670 = vmatprep.subr.bf16.mxu0 0
          %1671 = vmatpush1.bf16.msra.mxu0 0
          %1672 = vmatprep.subr.bf16.mxu0 0
          %1673 = vmatpush1.bf16.msra.mxu0 0
          %1674 = vmatprep.subr.bf16.mxu0 0
          %1675 = vmatpush1.bf16.msra.mxu0 0
          %1676 = vmatprep.subr.bf16.mxu0 0
          %1677 = vmatpush1.bf16.msra.mxu0 0
          %1678 = vmatprep.subr.bf16.mxu0 0
          %1679 = vmatpush1.bf16.msra.mxu0 0
          %1680 = vmatprep.subr.bf16.mxu0 0
          %1681 = vmatpush1.bf16.msra.mxu0 0
          %1682 = vmatprep.subr.bf16.mxu0 0
          %1683 = vmatpush1.bf16.msra.mxu0 0
          %1684 = vmatprep.subr.bf16.mxu0 0
          %1685 = vmatpush1.bf16.msra.mxu0 0
          %1686 = vmatprep.subr.bf16.mxu0 0
          %1687 = vmatpush1.bf16.msra.mxu0 0
          %1688 = vmatprep.subr.bf16.mxu0 0
          %1689 = vmatpush1.bf16.msra.mxu0 0
          %1690 = vmatprep.subr.bf16.mxu0 0
          %1691 = vmatpush1.bf16.msra.mxu0 0
          %1692 = vmatprep.subr.bf16.mxu0 0
          %1693 = vmatpush1.bf16.msra.mxu0 0
          %1694 = vmatprep.subr.bf16.mxu0 0
          %1695 = vmatpush1.bf16.msra.mxu0 0
          %1696 = vmatprep.mubr.bf16.mxu0 0
          %1697 = vmatmul.mubr.bf16.gmra.mrb[0].mxu0 %v1662
          %v1698 = vpop.f32.mrb[0].mxu0
          %v1699 = vadd.f32 0.0, %v1698
          %v1700 = vpop.f32.mrb[0].mxu0
          %v1701 = vpop.f32.mrb[0].mxu0
          %v1702 = vadd.f32 0.0, %v1701
          %v1703 = vpop.f32.mrb[0].mxu0
          %1704 = vdwg.mxu0
          %1707 = vrot.lane.b32.xlu0 %v949, 8
          %v1708 = vpop.permute.xlu0 %1707
          %1709 = vrot.lane.b32.xlu0 %v952, 8
          %v1710 = vpop.permute.xlu0 %1709
          %1715 = vrot.lane.b32.xlu0 %v1074, 16
          %v1716 = vpop.permute.xlu0 %1715
          %1717 = vrot.lane.b32.xlu0 %v1077, 16
          %v1718 = vpop.permute.xlu0 %1717
          %1723 = vrot.lane.b32.xlu0 %v1199, 24
          %v1724 = vpop.permute.xlu0 %1723
          %1725 = vrot.lane.b32.xlu0 %v1202, 24
          %v1726 = vpop.permute.xlu0 %1725
          %1731 = vrot.lane.b32.xlu0 %v1324, 32
          %v1732 = vpop.permute.xlu0 %1731
          %1733 = vrot.lane.b32.xlu0 %v1327, 32
          %v1734 = vpop.permute.xlu0 %1733
          %1739 = vrot.lane.b32.xlu0 %v1449, 40
          %v1740 = vpop.permute.xlu0 %1739
          %1741 = vrot.lane.b32.xlu0 %v1452, 40
          %v1742 = vpop.permute.xlu0 %1741
          %1747 = vrot.lane.b32.xlu0 %v1574, 48
          %v1748 = vpop.permute.xlu0 %1747
          %1749 = vrot.lane.b32.xlu0 %v1577, 48
          %v1750 = vpop.permute.xlu0 %1749
          %1755 = vrot.lane.b32.xlu0 %v1699, 56
          %v1756 = vpop.permute.xlu0 %1755
          %1757 = vrot.lane.b32.xlu0 %v1702, 56
          %v1758 = vpop.permute.xlu0 %1757
          %v1761 = vsel %vm707, %v821, %v1708
          %v1762 = vsel %vm707, %v824, %v1710
          %v1763 = vsel %vm759, %v1761, %v1716
          %v1764 = vsel %vm759, %v1762, %v1718
          %vm1765 = vcmask 195584
          %v1766 = vsel %vm1765, %v1763, %v1724
          %v1767 = vsel %vm1765, %v1764, %v1726
          %vm1768 = vcmask 261120
          %v1769 = vsel %vm1768, %v1766, %v1732
          %v1770 = vsel %vm1768, %v1767, %v1734
          %vm1771 = vcmask 326656
          %v1772 = vsel %vm1771, %v1769, %v1740
          %v1773 = vsel %vm1771, %v1770, %v1742
          %vm1774 = vcmask 392192
          %v1775 = vsel %vm1774, %v1772, %v1748
          %v1776 = vsel %vm1774, %v1773, %v1750
          %vm1777 = vcmask 457728
          %v1778 = vsel %vm1777, %v1775, %v1756
          %v1779 = vsel %vm1777, %v1776, %v1758
          %v1780 = vpack.c.bf16 %v1779, %v1778
          %v1781 = vld [vmem:[%s4] sm:$0xf]
          %v1782 = vld [vmem:[%s4 + $0x4] sm:$0xf]
          %v1783 = vld [vmem:[%s4 + $0x8] sm:$0xf]
          %v1784 = vld [vmem:[%s4 + $0xc] sm:$0xf]
          %v1785 = vld [vmem:[%s4 + $0x10] sm:$0xf]
          %v1786 = vld [vmem:[%s4 + $0x14] sm:$0xf]
          %v1787 = vld [vmem:[%s4 + $0x18] sm:$0xf]
          %v1788 = vld [vmem:[%s4 + $0x1c] sm:$0xf]
          %v1789 = vld [vmem:[#allocation4 + $0x3] sm:$0x1]
          %v1790 = vlaneseq
          %v1791 = vshrl.u32 %v1790, 7
          %v1792 = vsub.s32 0, %v1791
          %v1793 = vrot.slane %v1789, %v1792
          %v1802 = vunpack.c.l.b16 %v1781
          %v1803 = vunpack.c.l.b16 %v1782
          %v1804 = vunpack.c.l.b16 %v1783
          %v1805 = vunpack.c.l.b16 %v1784
          %v1806 = vunpack.c.l.b16 %v1785
          %v1807 = vunpack.c.l.b16 %v1786
          %v1808 = vunpack.c.l.b16 %v1787
          %v1809 = vunpack.c.l.b16 %v1788
          %v1810 = vpack.c.b16 %v1803, %v1802
          %v1811 = vpack.c.b16 %v1805, %v1804
          %v1812 = vpack.c.b16 %v1807, %v1806
          %v1813 = vpack.c.b16 %v1809, %v1808
          %v1819 = vsel %vm456, %v1780, 0
          %1821 = vmatprep.subr.bf16.mxu0 0
          %1822 = vmatpush1.bf16.msra.mxu0 %v1810
          %1823 = vmatprep.subr.bf16.mxu0 0
          %1824 = vmatpush1.bf16.msra.mxu0 %v1811
          %1825 = vmatprep.subr.bf16.mxu0 0
          %1826 = vmatpush1.bf16.msra.mxu0 %v1812
          %1827 = vmatprep.subr.bf16.mxu0 0
          %1828 = vmatpush1.bf16.msra.mxu0 %v1813
          %1829 = vmatprep.subr.bf16.mxu0 0
          %1830 = vmatpush1.bf16.msra.mxu0 0
          %1831 = vmatprep.subr.bf16.mxu0 0
          %1832 = vmatpush1.bf16.msra.mxu0 0
          %1833 = vmatprep.subr.bf16.mxu0 0
          %1834 = vmatpush1.bf16.msra.mxu0 0
          %1835 = vmatprep.subr.bf16.mxu0 0
          %1836 = vmatpush1.bf16.msra.mxu0 0
          %1837 = vmatprep.subr.bf16.mxu0 0
          %1838 = vmatpush1.bf16.msra.mxu0 0
          %1839 = vmatprep.subr.bf16.mxu0 0
          %1840 = vmatpush1.bf16.msra.mxu0 0
          %1841 = vmatprep.subr.bf16.mxu0 0
          %1842 = vmatpush1.bf16.msra.mxu0 0
          %1843 = vmatprep.subr.bf16.mxu0 0
          %1844 = vmatpush1.bf16.msra.mxu0 0
          %1845 = vmatprep.subr.bf16.mxu0 0
          %1846 = vmatpush1.bf16.msra.mxu0 0
          %1847 = vmatprep.subr.bf16.mxu0 0
          %1848 = vmatpush1.bf16.msra.mxu0 0
          %1849 = vmatprep.subr.bf16.mxu0 0
          %1850 = vmatpush1.bf16.msra.mxu0 0
          %1851 = vmatprep.subr.bf16.mxu0 0
          %1852 = vmatpush1.bf16.msra.mxu0 0
          %1853 = vmatprep.mubr.bf16.mxu0 0
          %1854 = vmatmul.mubr.bf16.gmra.mrb[0].mxu0 %v1819
          %v1855 = vpop.f32.mrb[0].mxu0
          %v1856 = vadd.f32 %v1793, %v1855
          %v1857 = vpop.f32.mrb[0].mxu0
          %v1858 = vpop.f32.mrb[0].mxu0
          %v1859 = vadd.f32 %v1793, %v1858
          %v1860 = vpop.f32.mrb[0].mxu0
          %1861 = vdwg.mxu0
          %v1862 = vadd.f32 %v1856, %v416
          %v1863 = vadd.f32 %v1859, %v417
          %v1864 = vld [vmem:[#allocation4 + $0x4] sm:$0x1]
          %v1865 = vld [vmem:[#allocation4 + $0x5] sm:$0x1]
          %v1866 = vsel %vm456, %v1862, 0.0
          %1867 = vadd.xlane.f32.xlu0 %v1866
          %v1868 = vpop.xlane.xlu0 %1867
          %v1869 = vsel %vm456, %v1863, 0.0
          %1870 = vadd.xlane.f32.xlu0 %v1869
          %v1871 = vpop.xlane.xlu0 %1870
          %v1872 = vrcp.pop 64.0
          %v1873 = vmul.f32 %v1868, %v1872
          %v1874 = vmul.f32 %v1871, %v1872
          %v1875 = vsub.f32 %v1862, %v1873
          %v1876 = vsub.f32 %v1863, %v1874
          %v1877 = vmul.f32 %v1875, %v1875
          %v1878 = vmul.f32 %v1876, %v1876
          %v1879 = vsel %vm456, %v1877, 0.0
          %1880 = vadd.xlane.f32.xlu0 %v1879
          %v1881 = vpop.xlane.xlu0 %1880
          %v1882 = vsel %vm456, %v1878, 0.0
          %1883 = vadd.xlane.f32.xlu0 %v1882
          %v1884 = vpop.xlane.xlu0 %1883
          %v1885 = vmul.f32 %v1881, %v1872
          %v1886 = vmul.f32 %v1884, %v1872
          %v1887 = vadd.f32 %v1885, 1e-05
          %v1888 = vadd.f32 %v1886, 1e-05
          %v1889 = vrsqrt.pop %v1887
          %v1890 = vrsqrt.pop %v1888
          %v1891 = vmul.f32 %v1875, %v1889
          %v1892 = vmul.f32 %v1876, %v1890
          %v1893 = vlaneseq
          %v1894 = vshrl.u32 %v1893, 7
          %v1895 = vsub.s32 0, %v1894
          %v1896 = vrot.slane %v1864, %v1895
          %v1897 = vmul.f32 %v1891, %v1896
          %v1898 = vmul.f32 %v1892, %v1896
          %v1899 = vlaneseq
          %v1900 = vshrl.u32 %v1899, 7
          %v1901 = vsub.s32 0, %v1900
          %v1902 = vrot.slane %v1865, %v1901
          %v1903 = vadd.f32 %v1897, %v1902
          %v1904 = vadd.f32 %v1898, %v1902
          %1905 = vst.msk [vmem:[#allocation2] sm:$0xff] %vm456, %v1903
          %1906 = vst.msk [vmem:[#allocation2 + $0x8] sm:$0xff] %vm456, %v1904
          %1907 = vst.msk [vmem:[#allocation3] sm:$0xff] %vm456, 0.0
          %1908 = vst.msk [vmem:[#allocation3 + $0x8] sm:$0xff] %vm456, 0.0
        $region72: #{attention_forward.1} parent=55 // pred_fallthru
          _
        %v1909 = vld [vmem:[#allocation2] sm:$0xff]
        %v1910 = vld [vmem:[#allocation2 + $0x8] sm:$0xff]
        %v1911 = vpack.c.bf16 %v1910, %v1909
        %v1912 = vld [vmem:[%s356] sm:$0xff]
        %v1913 = vld [vmem:[%s356 + $0x8] sm:$0xff]
        %v1914 = vld [vmem:[%s356 + $0x10] sm:$0xff]
        %v1915 = vld [vmem:[%s356 + $0x18] sm:$0xff]
        %v1916 = vld [vmem:[%s356 + $0x20] sm:$0xff]
        %v1917 = vld [vmem:[%s356 + $0x28] sm:$0xff]
        %v1918 = vld [vmem:[%s356 + $0x30] sm:$0xff]
        %v1919 = vld [vmem:[%s356 + $0x38] sm:$0xff]
        %v1920 = vld [vmem:[%s356 + $0x40] sm:$0xff]
        %v1921 = vld [vmem:[%s356 + $0x48] sm:$0xff]
        %v1922 = vld [vmem:[%s356 + $0x50] sm:$0xff]
        %v1923 = vld [vmem:[%s356 + $0x58] sm:$0xff]
        %v1924 = vld [vmem:[%s356 + $0x60] sm:$0xff]
        %v1925 = vld [vmem:[%s356 + $0x68] sm:$0xff]
        %v1926 = vld [vmem:[%s356 + $0x70] sm:$0xff]
        %v1927 = vld [vmem:[%s356 + $0x78] sm:$0xff]
        %v1928 = vld [vmem:[%s408] sm:$0xf]
        %v1930 = vlaneseq
        %v1931 = vshrl.u32 %v1930, 7
        %v1932 = vsub.s32 0, %v1931
        %v1933 = vrot.slane %v1928, %v1932
        %v1934 = vlaneseq
        %v1935 = vshrl.u32 %v1934, 7
        %v1936 = vsub.s32 1, %v1935
        %v1937 = vrot.slane %v1928, %v1936
        %v1938 = vlaneseq
        %v1939 = vshrl.u32 %v1938, 7
        %v1940 = vsub.s32 2, %v1939
        %v1941 = vrot.slane %v1928, %v1940
        %v1942 = vlaneseq
        %v1943 = vshrl.u32 %v1942, 7
        %v1944 = vsub.s32 3, %v1943
        %v1945 = vrot.slane %v1928, %v1944
        %v1966 = vunpack.c.l.b16 %v1912
        %v1967 = vunpack.c.h.b16 %v1912
        %v1968 = vunpack.c.l.b16 %v1913
        %v1969 = vunpack.c.h.b16 %v1913
        %v1970 = vunpack.c.l.b16 %v1914
        %v1971 = vunpack.c.h.b16 %v1914
        %v1972 = vunpack.c.l.b16 %v1915
        %v1973 = vunpack.c.h.b16 %v1915
        %v1974 = vunpack.c.l.b16 %v1916
        %v1975 = vunpack.c.h.b16 %v1916
        %v1976 = vunpack.c.l.b16 %v1917
        %v1977 = vunpack.c.h.b16 %v1917
        %v1978 = vunpack.c.l.b16 %v1918
        %v1979 = vunpack.c.h.b16 %v1918
        %v1980 = vunpack.c.l.b16 %v1919
        %v1981 = vunpack.c.h.b16 %v1919
        %v1982 = vunpack.c.l.b16 %v1920
        %v1983 = vunpack.c.h.b16 %v1920
        %v1984 = vunpack.c.l.b16 %v1921
        %v1985 = vunpack.c.h.b16 %v1921
        %v1986 = vunpack.c.l.b16 %v1922
        %v1987 = vunpack.c.h.b16 %v1922
        %v1988 = vunpack.c.l.b16 %v1923
        %v1989 = vunpack.c.h.b16 %v1923
        %v1990 = vunpack.c.l.b16 %v1924
        %v1991 = vunpack.c.h.b16 %v1924
        %v1992 = vunpack.c.l.b16 %v1925
        %v1993 = vunpack.c.h.b16 %v1925
        %v1994 = vunpack.c.l.b16 %v1926
        %v1995 = vunpack.c.h.b16 %v1926
        %v1996 = vunpack.c.l.b16 %v1927
        %v1997 = vunpack.c.h.b16 %v1927
        %v1998 = vpack.c.b16 %v1970, %v1966
        %v1999 = vpack.c.b16 %v1971, %v1967
        %v2000 = vpack.c.b16 %v1972, %v1968
        %v2001 = vpack.c.b16 %v1973, %v1969
        %v2002 = vpack.c.b16 %v1978, %v1974
        %v2003 = vpack.c.b16 %v1979, %v1975
        %v2004 = vpack.c.b16 %v1980, %v1976
        %v2005 = vpack.c.b16 %v1981, %v1977
        %v2006 = vpack.c.b16 %v1986, %v1982
        %v2007 = vpack.c.b16 %v1987, %v1983
        %v2008 = vpack.c.b16 %v1988, %v1984
        %v2009 = vpack.c.b16 %v1989, %v1985
        %v2010 = vpack.c.b16 %v1994, %v1990
        %v2011 = vpack.c.b16 %v1995, %v1991
        %v2012 = vpack.c.b16 %v1996, %v1992
        %v2013 = vpack.c.b16 %v1997, %v1993
        %vm2030 = vcmask 523264
        %v2032 = vsel %vm2030, %v1911, 0
        %2034 = vmatprep.subr.bf16.mxu0 %v1999
        %2035 = vmatpush1.bf16.msra.mxu0 %v1998
        %2036 = vmatprep.subr.bf16.mxu0 %v2003
        %2037 = vmatpush1.bf16.msra.mxu0 %v2002
        %2038 = vmatprep.subr.bf16.mxu0 %v2007
        %2039 = vmatpush1.bf16.msra.mxu0 %v2006
        %2040 = vmatprep.subr.bf16.mxu0 %v2011
        %2041 = vmatpush1.bf16.msra.mxu0 %v2010
        %2042 = vmatprep.subr.bf16.mxu0 0
        %2043 = vmatpush1.bf16.msra.mxu0 0
        %2044 = vmatprep.subr.bf16.mxu0 0
        %2045 = vmatpush1.bf16.msra.mxu0 0
        %2046 = vmatprep.subr.bf16.mxu0 0
        %2047 = vmatpush1.bf16.msra.mxu0 0
        %2048 = vmatprep.subr.bf16.mxu0 0
        %2049 = vmatpush1.bf16.msra.mxu0 0
        %2050 = vmatprep.subr.bf16.mxu0 0
        %2051 = vmatpush1.bf16.msra.mxu0 0
        %2052 = vmatprep.subr.bf16.mxu0 0
        %2053 = vmatpush1.bf16.msra.mxu0 0
        %2054 = vmatprep.subr.bf16.mxu0 0
        %2055 = vmatpush1.bf16.msra.mxu0 0
        %2056 = vmatprep.subr.bf16.mxu0 0
        %2057 = vmatpush1.bf16.msra.mxu0 0
        %2058 = vmatprep.subr.bf16.mxu0 0
        %2059 = vmatpush1.bf16.msra.mxu0 0
        %2060 = vmatprep.subr.bf16.mxu0 0
        %2061 = vmatpush1.bf16.msra.mxu0 0
        %2062 = vmatprep.subr.bf16.mxu0 0
        %2063 = vmatpush1.bf16.msra.mxu0 0
        %2064 = vmatprep.subr.bf16.mxu0 0
        %2065 = vmatpush1.bf16.msra.mxu0 0
        %2066 = vmatprep.mubr.bf16.mxu0 0
        %2067 = vmatmul.mubr.bf16.gmra.mrb[0].mxu0 %v2032
        %v2068 = vpop.f32.mrb[0].mxu0
        %v2069 = vadd.f32 %v1933, %v2068
        %v2070 = vpop.f32.mrb[0].mxu0
        %v2071 = vadd.f32 %v1937, %v2070
        %v2072 = vpop.f32.mrb[0].mxu0
        %v2073 = vadd.f32 %v1933, %v2072
        %v2074 = vpop.f32.mrb[0].mxu0
        %v2075 = vadd.f32 %v1937, %v2074
        %2076 = vdwg.mxu0
        %2077 = vmatprep.subr.bf16.mxu0 %v2001
        %2078 = vmatpush1.bf16.msra.mxu0 %v2000
        %2079 = vmatprep.subr.bf16.mxu0 %v2005
        %2080 = vmatpush1.bf16.msra.mxu0 %v2004
        %2081 = vmatprep.subr.bf16.mxu0 %v2009
        %2082 = vmatpush1.bf16.msra.mxu0 %v2008
        %2083 = vmatprep.subr.bf16.mxu0 %v2013
        %2084 = vmatpush1.bf16.msra.mxu0 %v2012
        %2085 = vmatprep.subr.bf16.mxu0 0
        %2086 = vmatpush1.bf16.msra.mxu0 0
        %2087 = vmatprep.subr.bf16.mxu0 0
        %2088 = vmatpush1.bf16.msra.mxu0 0
        %2089 = vmatprep.subr.bf16.mxu0 0
        %2090 = vmatpush1.bf16.msra.mxu0 0
        %2091 = vmatprep.subr.bf16.mxu0 0
        %2092 = vmatpush1.bf16.msra.mxu0 0
        %2093 = vmatprep.subr.bf16.mxu0 0
        %2094 = vmatpush1.bf16.msra.mxu0 0
        %2095 = vmatprep.subr.bf16.mxu0 0
        %2096 = vmatpush1.bf16.msra.mxu0 0
        %2097 = vmatprep.subr.bf16.mxu0 0
        %2098 = vmatpush1.bf16.msra.mxu0 0
        %2099 = vmatprep.subr.bf16.mxu0 0
        %2100 = vmatpush1.bf16.msra.mxu0 0
        %2101 = vmatprep.subr.bf16.mxu0 0
        %2102 = vmatpush1.bf16.msra.mxu0 0
        %2103 = vmatprep.subr.bf16.mxu0 0
        %2104 = vmatpush1.bf16.msra.mxu0 0
        %2105 = vmatprep.subr.bf16.mxu0 0
        %2106 = vmatpush1.bf16.msra.mxu0 0
        %2107 = vmatprep.subr.bf16.mxu0 0
        %2108 = vmatpush1.bf16.msra.mxu0 0
        %2109 = vmatprep.mubr.bf16.mxu0 0
        %2110 = vmatmul.mubr.bf16.gmra.mrb[0].mxu0 %v2032
        %v2111 = vpop.f32.mrb[0].mxu0
        %v2112 = vadd.f32 %v1941, %v2111
        %v2113 = vpop.f32.mrb[0].mxu0
        %v2114 = vadd.f32 %v1945, %v2113
        %v2115 = vpop.f32.mrb[0].mxu0
        %v2116 = vadd.f32 %v1941, %v2115
        %v2117 = vpop.f32.mrb[0].mxu0
        %v2118 = vadd.f32 %v1945, %v2117
        %2119 = vdwg.mxu0
        %v2120 = vmax.f32 %v2069, 0.0
        %v2121 = vmax.f32 %v2071, 0.0
        %v2122 = vmax.f32 %v2112, 0.0
        %v2123 = vmax.f32 %v2114, 0.0
        %v2124 = vmax.f32 %v2073, 0.0
        %v2125 = vmax.f32 %v2075, 0.0
        %v2126 = vmax.f32 %v2116, 0.0
        %v2127 = vmax.f32 %v2118, 0.0
        %v2128 = vld [vmem:[#allocation3] sm:$0xff]
        %v2129 = vld [vmem:[#allocation3 + $0x8] sm:$0xff]
        %v2130 = vpack.c.bf16 %v2124, %v2120
        %v2131 = vpack.c.bf16 %v2125, %v2121
        %v2132 = vpack.c.bf16 %v2126, %v2122
        %v2133 = vpack.c.bf16 %v2127, %v2123
        %v2134 = vld [vmem:[%s365] sm:$0xff]
        %v2135 = vld [vmem:[%s365 + $0x8] sm:$0xff]
        %v2136 = vld [vmem:[%s365 + $0x10] sm:$0xff]
        %v2137 = vld [vmem:[%s365 + $0x18] sm:$0xff]
        %v2138 = vld [vmem:[%s365 + $0x20] sm:$0xff]
        %v2139 = vld [vmem:[%s365 + $0x28] sm:$0xff]
        %v2140 = vld [vmem:[%s365 + $0x30] sm:$0xff]
        %v2141 = vld [vmem:[%s365 + $0x38] sm:$0xff]
        %v2142 = vld [vmem:[%s365 + $0x40] sm:$0xff]
        %v2143 = vld [vmem:[%s365 + $0x48] sm:$0xff]
        %v2144 = vld [vmem:[%s365 + $0x50] sm:$0xff]
        %v2145 = vld [vmem:[%s365 + $0x58] sm:$0xff]
        %v2146 = vld [vmem:[%s365 + $0x60] sm:$0xff]
        %v2147 = vld [vmem:[%s365 + $0x68] sm:$0xff]
        %v2148 = vld [vmem:[%s365 + $0x70] sm:$0xff]
        %v2149 = vld [vmem:[%s365 + $0x78] sm:$0xff]
        %v2166 = vunpack.c.l.b16 %v2134
        %v2167 = vunpack.c.h.b16 %v2134
        %v2168 = vunpack.c.l.b16 %v2135
        %v2169 = vunpack.c.h.b16 %v2135
        %v2170 = vunpack.c.l.b16 %v2136
        %v2171 = vunpack.c.h.b16 %v2136
        %v2172 = vunpack.c.l.b16 %v2137
        %v2173 = vunpack.c.h.b16 %v2137
        %v2174 = vunpack.c.l.b16 %v2138
        %v2175 = vunpack.c.h.b16 %v2138
        %v2176 = vunpack.c.l.b16 %v2139
        %v2177 = vunpack.c.h.b16 %v2139
        %v2178 = vunpack.c.l.b16 %v2140
        %v2179 = vunpack.c.h.b16 %v2140
        %v2180 = vunpack.c.l.b16 %v2141
        %v2181 = vunpack.c.h.b16 %v2141
        %v2182 = vunpack.c.l.b16 %v2142
        %v2183 = vunpack.c.h.b16 %v2142
        %v2184 = vunpack.c.l.b16 %v2143
        %v2185 = vunpack.c.h.b16 %v2143
        %v2186 = vunpack.c.l.b16 %v2144
        %v2187 = vunpack.c.h.b16 %v2144
        %v2188 = vunpack.c.l.b16 %v2145
        %v2189 = vunpack.c.h.b16 %v2145
        %v2190 = vunpack.c.l.b16 %v2146
        %v2191 = vunpack.c.h.b16 %v2146
        %v2192 = vunpack.c.l.b16 %v2147
        %v2193 = vunpack.c.h.b16 %v2147
        %v2194 = vunpack.c.l.b16 %v2148
        %v2195 = vunpack.c.h.b16 %v2148
        %v2196 = vunpack.c.l.b16 %v2149
        %v2197 = vunpack.c.h.b16 %v2149
        %v2198 = vpack.c.b16 %v2170, %v2166
        %v2199 = vpack.c.b16 %v2171, %v2167
        %v2200 = vpack.c.b16 %v2172, %v2168
        %v2201 = vpack.c.b16 %v2173, %v2169
        %v2202 = vpack.c.b16 %v2178, %v2174
        %v2203 = vpack.c.b16 %v2179, %v2175
        %v2204 = vpack.c.b16 %v2180, %v2176
        %v2205 = vpack.c.b16 %v2181, %v2177
        %v2206 = vpack.c.b16 %v2186, %v2182
        %v2207 = vpack.c.b16 %v2187, %v2183
        %v2208 = vpack.c.b16 %v2188, %v2184
        %v2209 = vpack.c.b16 %v2189, %v2185
        %v2210 = vpack.c.b16 %v2194, %v2190
        %v2211 = vpack.c.b16 %v2195, %v2191
        %v2212 = vpack.c.b16 %v2196, %v2192
        %v2213 = vpack.c.b16 %v2197, %v2193
        %2230 = vmatprep.subr.bf16.mxu0 %v2199
        %2231 = vmatpush1.bf16.xpose.msra.mxu0 %v2198
        %2232 = vmatprep.subr.bf16.mxu0 %v2203
        %2233 = vmatpush1.bf16.xpose.msra.mxu0 %v2202
        %2234 = vmatprep.subr.bf16.mxu0 %v2207
        %2235 = vmatpush1.bf16.xpose.msra.mxu0 %v2206
        %2236 = vmatprep.subr.bf16.mxu0 %v2211
        %2237 = vmatpush1.bf16.xpose.msra.mxu0 %v2210
        %2238 = vmatprep.subr.bf16.mxu0 0
        %2239 = vmatpush1.bf16.xpose.msra.mxu0 0
        %2240 = vmatprep.subr.bf16.mxu0 0
        %2241 = vmatpush1.bf16.xpose.msra.mxu0 0
        %2242 = vmatprep.subr.bf16.mxu0 0
        %2243 = vmatpush1.bf16.xpose.msra.mxu0 0
        %2244 = vmatprep.subr.bf16.mxu0 0
        %2245 = vmatpush1.bf16.xpose.msra.mxu0 0
        %2246 = vmatprep.subr.bf16.mxu0 0
        %2247 = vmatpush1.bf16.xpose.msra.mxu0 0
        %2248 = vmatprep.subr.bf16.mxu0 0
        %2249 = vmatpush1.bf16.xpose.msra.mxu0 0
        %2250 = vmatprep.subr.bf16.mxu0 0
        %2251 = vmatpush1.bf16.xpose.msra.mxu0 0
        %2252 = vmatprep.subr.bf16.mxu0 0
        %2253 = vmatpush1.bf16.xpose.msra.mxu0 0
        %2254 = vmatprep.subr.bf16.mxu0 0
        %2255 = vmatpush1.bf16.xpose.msra.mxu0 0
        %2256 = vmatprep.subr.bf16.mxu0 0
        %2257 = vmatpush1.bf16.xpose.msra.mxu0 0
        %2258 = vmatprep.subr.bf16.mxu0 0
        %2259 = vmatpush1.bf16.xpose.msra.mxu0 0
        %2260 = vmatprep.subr.bf16.mxu0 0
        %2261 = vmatpush1.bf16.xpose.msra.mxu0 0
        %2262 = vmatprep.mubr.bf16.mxu0 %v2131
        %2263 = vmatmul.mubr.bf16.gmra.mrb[0].mxu0 %v2130
        %v2264 = vpop.f32.mrb[0].mxu0
        %v2265 = vadd.f32 0.0, %v2264
        %v2266 = vpop.f32.mrb[0].mxu0
        %v2267 = vpop.f32.mrb[0].mxu0
        %v2268 = vadd.f32 0.0, %v2267
        %v2269 = vpop.f32.mrb[0].mxu0
        %2270 = vdwg.mxu0
        %2271 = vmatprep.subr.bf16.mxu0 %v2201
        %2272 = vmatpush1.bf16.xpose.msra.mxu0 %v2200
        %2273 = vmatprep.subr.bf16.mxu0 %v2205
        %2274 = vmatpush1.bf16.xpose.msra.mxu0 %v2204
        %2275 = vmatprep.subr.bf16.mxu0 %v2209
        %2276 = vmatpush1.bf16.xpose.msra.mxu0 %v2208
        %2277 = vmatprep.subr.bf16.mxu0 %v2213
        %2278 = vmatpush1.bf16.xpose.msra.mxu0 %v2212
        %2279 = vmatprep.subr.bf16.mxu0 0
        %2280 = vmatpush1.bf16.xpose.msra.mxu0 0
        %2281 = vmatprep.subr.bf16.mxu0 0
        %2282 = vmatpush1.bf16.xpose.msra.mxu0 0
        %2283 = vmatprep.subr.bf16.mxu0 0
        %2284 = vmatpush1.bf16.xpose.msra.mxu0 0
        %2285 = vmatprep.subr.bf16.mxu0 0
        %2286 = vmatpush1.bf16.xpose.msra.mxu0 0
        %2287 = vmatprep.subr.bf16.mxu0 0
        %2288 = vmatpush1.bf16.xpose.msra.mxu0 0
        %2289 = vmatprep.subr.bf16.mxu0 0
        %2290 = vmatpush1.bf16.xpose.msra.mxu0 0
        %2291 = vmatprep.subr.bf16.mxu0 0
        %2292 = vmatpush1.bf16.xpose.msra.mxu0 0
        %2293 = vmatprep.subr.bf16.mxu0 0
        %2294 = vmatpush1.bf16.xpose.msra.mxu0 0
        %2295 = vmatprep.subr.bf16.mxu0 0
        %2296 = vmatpush1.bf16.xpose.msra.mxu0 0
        %2297 = vmatprep.subr.bf16.mxu0 0
        %2298 = vmatpush1.bf16.xpose.msra.mxu0 0
        %2299 = vmatprep.subr.bf16.mxu0 0
        %2300 = vmatpush1.bf16.xpose.msra.mxu0 0
        %2301 = vmatprep.subr.bf16.mxu0 0
        %2302 = vmatpush1.bf16.xpose.msra.mxu0 0
        %2303 = vmatprep.mubr.bf16.mxu0 %v2133
        %2304 = vmatmul.mubr.bf16.gmra.mrb[0].mxu0 %v2132
        %v2305 = vpop.f32.mrb[0].mxu0
        %v2306 = vadd.f32 %v2265, %v2305
        %v2307 = vpop.f32.mrb[0].mxu0
        %v2308 = vpop.f32.mrb[0].mxu0
        %v2309 = vadd.f32 %v2268, %v2308
        %v2310 = vpop.f32.mrb[0].mxu0
        %2311 = vdwg.mxu0
        %v2312 = vadd.f32 %v2128, %v2306
        %v2313 = vadd.f32 %v2129, %v2309
        %2314 = vst.msk [vmem:[#allocation3] sm:$0xff] %vm2030, %v2312
        %2315 = vst.msk [vmem:[#allocation3 + $0x8] sm:$0xff] %vm2030, %v2313
        %p2316 = scmp.eq.s32.totalorder %s24, 1
        // Predicated region
        $region73: #{attention_forward.1} parent=55 // pred_check
          %p2317 = pneg %p2316
        $region74: #{attention_forward.1} parent=55 // pred_check_branch
          %2319 = sbr.rel (%p2317) target = $region76
        $region75: #{attention_forward.1} parent=55 // pred_region
          %v2320 = vld [vmem:[#allocation3] sm:$0xff]
          %v2321 = vld [vmem:[#allocation3 + $0x8] sm:$0xff]
          %v2322 = vld [vmem:[#allocation4 + $0x6] sm:$0x1]
          %v2323 = vlaneseq
          %v2324 = vshrl.u32 %v2323, 7
          %v2325 = vsub.s32 0, %v2324
          %v2326 = vrot.slane %v2322, %v2325
          %v2327 = vadd.f32 %v2320, %v2326
          %v2328 = vadd.f32 %v2321, %v2326
          %v2329 = vld [vmem:[#allocation2] sm:$0xff]
          %v2330 = vld [vmem:[#allocation2 + $0x8] sm:$0xff]
          %v2331 = vadd.f32 %v2329, %v2327
          %v2332 = vadd.f32 %v2330, %v2328
          %v2333 = vld [vmem:[#allocation4 + $0x7] sm:$0x1]
          %v2334 = vld [vmem:[#allocation4 + $0x8] sm:$0x1]
          %v2335 = vsel %vm2030, %v2331, 0.0
          %2336 = vadd.xlane.f32.xlu0 %v2335
          %v2337 = vpop.xlane.xlu0 %2336
          %v2338 = vsel %vm2030, %v2332, 0.0
          %2339 = vadd.xlane.f32.xlu0 %v2338
          %v2340 = vpop.xlane.xlu0 %2339
          %v2341 = vrcp.pop 64.0
          %v2342 = vmul.f32 %v2337, %v2341
          %v2343 = vmul.f32 %v2340, %v2341
          %v2344 = vsub.f32 %v2331, %v2342
          %v2345 = vsub.f32 %v2332, %v2343
          %v2346 = vmul.f32 %v2344, %v2344
          %v2347 = vmul.f32 %v2345, %v2345
          %v2348 = vsel %vm2030, %v2346, 0.0
          %2349 = vadd.xlane.f32.xlu0 %v2348
          %v2350 = vpop.xlane.xlu0 %2349
          %v2351 = vsel %vm2030, %v2347, 0.0
          %2352 = vadd.xlane.f32.xlu0 %v2351
          %v2353 = vpop.xlane.xlu0 %2352
          %v2354 = vmul.f32 %v2350, %v2341
          %v2355 = vmul.f32 %v2353, %v2341
          %v2356 = vadd.f32 %v2354, 1e-05
          %v2357 = vadd.f32 %v2355, 1e-05
          %v2358 = vrsqrt.pop %v2356
          %v2359 = vrsqrt.pop %v2357
          %v2360 = vmul.f32 %v2344, %v2358
          %v2361 = vmul.f32 %v2345, %v2359
          %v2362 = vlaneseq
          %v2363 = vshrl.u32 %v2362, 7
          %v2364 = vsub.s32 0, %v2363
          %v2365 = vrot.slane %v2333, %v2364
          %v2366 = vmul.f32 %v2360, %v2365
          %v2367 = vmul.f32 %v2361, %v2365
          %v2368 = vlaneseq
          %v2369 = vshrl.u32 %v2368, 7
          %v2370 = vsub.s32 0, %v2369
          %v2371 = vrot.slane %v2334, %v2370
          %v2372 = vadd.f32 %v2366, %v2371
          %v2373 = vadd.f32 %v2367, %v2371
          %2374 = vst.msk [vmem:[%s9] sm:$0xff] %vm2030, %v2372
          %2375 = vst.msk [vmem:[%s9 + $0x8] sm:$0xff] %vm2030, %v2373
        $region76: #{attention_forward.1} parent=55 // pred_fallthru
          _
        // Predicated region
        $region77: #{attention_forward.1} parent=55 // pred_check
          %p2376 = pneg %p241
        $region78: #{attention_forward.1} parent=55 // pred_check_branch
          %2378 = sbr.rel (%p2376) target = $region80
        $region79: #{attention_forward.1} parent=55 // pred_region
          _
        $region80: #{attention_forward.1} parent=55 // pred_fallthru
          _
        // Predicated region
        $region81: #{attention_forward.1} parent=55 // pred_check
          %p2379 = pneg %p241
        $region82: #{attention_forward.1} parent=55 // pred_check_branch
          %2381 = sbr.rel (%p2379) target = $region84
        $region83: #{attention_forward.1} parent=55 // pred_region
          _
        $region84: #{attention_forward.1} parent=55 // pred_fallthru
          _
      $region56: #{attention_forward.1} parent=5 // pred_fallthru
        _
      %p2382 = scmp.le.s32.totalorder 2, %s19
      // Predicated region
      $region85: #{attention_forward.1} parent=5 // pred_check
        %p2383 = pneg %p2382
      $region86: #{attention_forward.1} parent=5 // pred_check_branch
        %2385 = sbr.rel (%p2383) target = $region88
      $region87: #{attention_forward.1} parent=5 // pred_region
        %s2386 = ssub.s32 %s19, 2
      $region88: #{attention_forward.1} parent=5 // pred_fallthru
        _
    $region6: #{attention_forward.1} parent=1 // loop_footer
      %s23 = sadd.s32 1, %s19
    $region7: #{attention_forward.1} parent=1 // loop_footer_branch
      %18 = sbr.rel target = $region3
    $region8: #{attention_forward.1} parent=1 // loop_exit
      _
    %2387 = vsyncpa [#allocation5], 1
    %s2388 = scalar_lea.sflag [#allocation5], 1
    %2389 = vsyncpa %s2388, 1
    %2390 = vsyncpa [#allocation7], 1
    %s2391 = scalar_lea.sflag [#allocation7], 1
    %2392 = vsyncpa %s2391, 1

</llo_original>
